<compile_context>
chip_gen: v7x
topology: tpu7x:2x2x1
jax: 0.10.0
libtpu: 0.0.40
codegen_flags: <defaults>
</compile_context>

<pallas_src>
import functools

import jax
import jax.numpy as jnp
from jax.experimental import pallas as pl
from jax.experimental.pallas import tpu as pltpu


def _mlp_kernel(xT_ref, w_in_ref, b_in_ref, w_hid_ref, b_hid_ref,
                w_out_ref, b_out_ref, oT_ref, *, num_hidden_layers,
                compute_dtype):
    cd = compute_dtype

    # Input layer (transposed): (H, d_in) @ (d_in, TB) + (H, 1) -> tanh
    h = jnp.dot(w_in_ref[...].astype(cd), xT_ref[...].astype(cd),
                preferred_element_type=jnp.float32)
    h = jnp.tanh(h + b_in_ref[...])

    # Hidden layers: (H, H) @ (H, TB) + (H, 1) -> tanh.
    # Statically unrolled so the LLO scheduler can overlap EUP tanh / VPU bias
    # adds with the next layer's MXU pushes (do not convert to a dynamic loop).
    for l in range(num_hidden_layers):
        h = jnp.dot(w_hid_ref[l].astype(cd), h.astype(cd),
                    preferred_element_type=jnp.float32)
        h = jnp.tanh(h + b_hid_ref[l])

    # Output layer: (d_out, H) @ (H, TB) + (d_out, 1).  Lane-dense along batch.
    y = jnp.dot(w_out_ref[...].astype(cd), h.astype(cd),
                preferred_element_type=jnp.float32)
    oT_ref[...] = (y + b_out_ref[...]).astype(oT_ref.dtype)


def _vmem_bytes_estimate(d_in, H, L, d_out, block_b, itemsize):
    weights = H * d_in + H + L * H * H + L * H + d_out * H + d_out
    io_tiles = d_in * block_b + d_out * block_b
    hidden_act = H * block_b
    # Every BlockSpec operand is double-buffered by the pipeline; the (H, TB)
    # intermediate activation lives once per step.
    return (2 * (weights + io_tiles) + 2 * hidden_act) * itemsize


def mlp_forward(x, params, *, block_b=None, compute_dtype=jnp.float32):
    """MLP forward pass with a Pallas TPU kernel.

    x: (B, input_dim) float32
    params (PyTorch nn.Linear layout, i.e. weight = (out, in)):
      w_in (H, d_in), b_in (H, 1), w_hid (L, H, H), b_hid (L, H, 1),
      w_out (d_out, H), b_out (d_out, 1)

    compute_dtype=jnp.bfloat16 casts matmul operands to bf16 (f32 accumulation)
    for ~2-4x MXU throughput when bf16-level error is acceptable.
    """
    w_in, b_in = params["w_in"], params["b_in"]
    w_hid, b_hid = params["w_hid"], params["b_hid"]
    w_out, b_out = params["w_out"], params["b_out"]

    B, d_in = x.shape
    H = w_in.shape[0]
    L = w_hid.shape[0]
    d_out = w_out.shape[0]

    if block_b is None:
        # One large batch tile by default (per-step pipeline overhead dominates
        # tiny tiles).  Only for big batches split into two lane-aligned tiles
        # so v7x megacore ("parallel" axis) gets one meaningful chunk per core.
        if B >= 1024 and B % 512 == 0:
            block_b = B // 2
        else:
            block_b = B
    assert B % block_b == 0, "batch must be divisible by block_b"
    assert block_b == B or block_b % 128 == 0, \
        "batch tile must be the full batch or a multiple of 128 lanes"

    grid = (B // block_b,)

    # VMEM budget guard: all weights are resident (and double-buffered) per grid
    # step.  Budget against v7x's 64 MiB (the smallest of v5e/v6e/v7x).
    # At large H, switch the hidden-weight BlockSpec to per-layer blocks
    # ((1, H, H) indexed over a layer grid axis) or tile H instead.
    vmem_est = _vmem_bytes_estimate(d_in, H, L, d_out, block_b,
                                    jnp.dtype(x.dtype).itemsize)
    assert vmem_est <= 60 * 1024 * 1024, (
        f"weights-resident design needs ~{vmem_est/2**20:.1f} MiB VMEM; "
        "re-tile for v7x's 64 MiB budget")

    # Layout plumbing only: put batch on the lane axis.
    xT = x.T  # (d_in, B)

    kernel = functools.partial(_mlp_kernel, num_hidden_layers=L,
                               compute_dtype=compute_dtype)

    in_specs = [
        pl.BlockSpec((d_in, block_b), lambda i: (0, i)),     # x^T tile
        pl.BlockSpec((H, d_in), lambda i: (0, 0)),           # w_in
        pl.BlockSpec((H, 1), lambda i: (0, 0)),              # b_in
        pl.BlockSpec((L, H, H), lambda i: (0, 0, 0)),        # stacked hidden W
        pl.BlockSpec((L, H, 1), lambda i: (0, 0, 0)),        # stacked hidden b
        pl.BlockSpec((d_out, H), lambda i: (0, 0)),          # w_out
        pl.BlockSpec((d_out, 1), lambda i: (0, 0)),          # b_out
    ]
    out_spec = pl.BlockSpec((d_out, block_b), lambda i: (0, i))  # y^T tile

    yT = pl.pallas_call(
        kernel,
        out_shape=jax.ShapeDtypeStruct((d_out, B), x.dtype),
        grid_spec=pl.GridSpec(
            grid=grid,
            in_specs=in_specs,
            out_specs=out_spec,
        ),
        compiler_params=pltpu.CompilerParams(
            dimension_semantics=("parallel",),
            vmem_limit_bytes=64 * 1024 * 1024),
    )(xT, w_in, b_in, w_hid, b_hid, w_out, b_out)

    return yT.T  # (B, d_out)


def init_mlp_params(key, input_dim=4, hidden_dim=128, output_dim=1,
                    num_layers=4):
    """nn.Linear-style init, U(-1/sqrt(fan_in), 1/sqrt(fan_in)); weights kept in
    PyTorch (out_features, in_features) layout, biases as (out_features, 1)."""
    L = num_layers - 1  # number of hidden (H->H) layers
    keys = jax.random.split(key, 2 * (L + 2))

    def lin(kw, kb, fan_in, fan_out):
        bound = 1.0 / jnp.sqrt(jnp.float32(fan_in))
        w = jax.random.uniform(kw, (fan_out, fan_in), jnp.float32, -bound, bound)
        b = jax.random.uniform(kb, (fan_out, 1), jnp.float32, -bound, bound)
        return w, b

    w_in, b_in = lin(keys[0], keys[1], input_dim, hidden_dim)

    w_hid_list, b_hid_list = [], []
    for l in range(L):
        w, b = lin(keys[2 + 2 * l], keys[3 + 2 * l], hidden_dim, hidden_dim)
        w_hid_list.append(w)
        b_hid_list.append(b)
    w_hid = jnp.stack(w_hid_list, axis=0)              # (L, H, H)
    b_hid = jnp.stack(b_hid_list, axis=0)              # (L, H, 1)

    w_out, b_out = lin(keys[2 + 2 * L], keys[3 + 2 * L], hidden_dim, output_dim)

    return {"w_in": w_in, "b_in": b_in,
            "w_hid": w_hid, "b_hid": b_hid,
            "w_out": w_out, "b_out": b_out}


def mlp_reference(x, params):
    """Pure-JAX reference in the same transposed orientation as the kernel."""
    hT = jnp.tanh(params["w_in"] @ x.T + params["b_in"])
    for l in range(params["w_hid"].shape[0]):
        hT = jnp.tanh(params["w_hid"][l] @ hT + params["b_hid"][l])
    return (params["w_out"] @ hT + params["b_out"]).T


if __name__ == "__main__":
    key = jax.random.PRNGKey(0)
    k_param, k_x = jax.random.split(key)

    input_dim, hidden_dim, output_dim, num_layers = 4, 128, 1, 4
    batch = 256

    params = init_mlp_params(k_param, input_dim, hidden_dim, output_dim,
                             num_layers)
    x = jax.random.normal(k_x, (batch, input_dim), jnp.float32)

    out = mlp_forward(x, params)           # single lane-dense batch tile
    out = jax.block_until_ready(out)

    ref = mlp_reference(x, params)
    assert out.shape == (batch, output_dim)
    assert jnp.allclose(out, ref, atol=1e-4, rtol=1e-4), "mismatch vs reference"

    print("KERNEL_OK")
</pallas_src>

<mosaic_0001>
module attributes {stable_mosaic.version = 11 : i64} {
  func.func @_mlp_kernel(%arg0: i32, %arg1: memref<4x256xf32, #tpu.memory_space<vmem>>, %arg2: memref<128x4xf32, #tpu.memory_space<vmem>>, %arg3: memref<128x1xf32, #tpu.memory_space<vmem>>, %arg4: memref<3x128x128xf32, #tpu.memory_space<vmem>>, %arg5: memref<3x128x1xf32, #tpu.memory_space<vmem>>, %arg6: memref<1x128xf32, #tpu.memory_space<vmem>>, %arg7: memref<1x1xf32, #tpu.memory_space<vmem>>, %arg8: memref<1x256xf32, #tpu.memory_space<vmem>>) attributes {dimension_semantics = [#tpu.dimension_semantics<parallel>], iteration_bounds = array<i64: 1>, scalar_prefetch = 0 : i64, scratch_operands = 0 : i64, tpu.core_type = #tpu.core_type<tc>, window_params = [{transform_indices = @transform_0, window_bounds = array<i64: 4, 256>}, {pipeline_mode = #tpu.pipeline_mode<synchronous>, transform_indices = @transform_1, window_bounds = array<i64: 128, 4>}, {pipeline_mode = #tpu.pipeline_mode<synchronous>, transform_indices = @transform_2, window_bounds = array<i64: 128, 1>}, {pipeline_mode = #tpu.pipeline_mode<synchronous>, transform_indices = @transform_3, window_bounds = array<i64: 3, 128, 128>}, {pipeline_mode = #tpu.pipeline_mode<synchronous>, transform_indices = @transform_4, window_bounds = array<i64: 3, 128, 1>}, {pipeline_mode = #tpu.pipeline_mode<synchronous>, transform_indices = @transform_5, window_bounds = array<i64: 1, 128>}, {pipeline_mode = #tpu.pipeline_mode<synchronous>, transform_indices = @transform_6, window_bounds = array<i64: 1, 1>}, {transform_indices = @transform_7, window_bounds = array<i64: 1, 256>}]} {
    %c0 = arith.constant 0 : index
    %c0_0 = arith.constant 0 : index
    %0 = vector.load %arg2[%c0, %c0_0] : memref<128x4xf32, #tpu.memory_space<vmem>>, vector<128x4xf32>
    %c0_1 = arith.constant 0 : index
    %c0_2 = arith.constant 0 : index
    %1 = vector.load %arg1[%c0_1, %c0_2] : memref<4x256xf32, #tpu.memory_space<vmem>>, vector<4x256xf32>
    %cst = arith.constant dense<0.000000e+00> : vector<128x256xf32>
    %2 = tpu.matmul %0, %1, %cst {dimension_numbers = #tpu.dot_dimension_numbers<[1], [0], [0], [1], [0, 0, 1, 1], [], []>} : vector<128x4xf32>, vector<4x256xf32>, vector<128x256xf32> -> vector<128x256xf32>
    %c0_3 = arith.constant 0 : index
    %c0_4 = arith.constant 0 : index
    %3 = vector.load %arg3[%c0_3, %c0_4] : memref<128x1xf32, #tpu.memory_space<vmem>>, vector<128x1xf32>
    %4 = vector.broadcast %3 : vector<128x1xf32> to vector<128x256xf32>
    %5 = arith.addf %2, %4 : vector<128x256xf32>
    %6 = math.tanh %5 : vector<128x256xf32>
    %c0_5 = arith.constant 0 : index
    %c0_6 = arith.constant 0 : index
    %c0_7 = arith.constant 0 : index
    %7 = vector.load %arg4[%c0_5, %c0_6, %c0_7] : memref<3x128x128xf32, #tpu.memory_space<vmem>>, vector<1x128x128xf32>
    %8 = vector.shape_cast %7 : vector<1x128x128xf32> to vector<128x128xf32>
    %cst_8 = arith.constant dense<0.000000e+00> : vector<128x256xf32>
    %9 = tpu.matmul %8, %6, %cst_8 {dimension_numbers = #tpu.dot_dimension_numbers<[1], [0], [0], [1], [0, 0, 1, 1], [], []>} : vector<128x128xf32>, vector<128x256xf32>, vector<128x256xf32> -> vector<128x256xf32>
    %c0_9 = arith.constant 0 : index
    %c0_10 = arith.constant 0 : index
    %c0_11 = arith.constant 0 : index
    %10 = vector.load %arg5[%c0_9, %c0_10, %c0_11] : memref<3x128x1xf32, #tpu.memory_space<vmem>>, vector<1x128x1xf32>
    %11 = vector.shape_cast %10 : vector<1x128x1xf32> to vector<128x1xf32>
    %12 = vector.broadcast %11 : vector<128x1xf32> to vector<128x256xf32>
    %13 = arith.addf %9, %12 : vector<128x256xf32>
    %14 = math.tanh %13 : vector<128x256xf32>
    %c1 = arith.constant 1 : index
    %c0_12 = arith.constant 0 : index
    %c0_13 = arith.constant 0 : index
    %15 = vector.load %arg4[%c1, %c0_12, %c0_13] : memref<3x128x128xf32, #tpu.memory_space<vmem>>, vector<1x128x128xf32>
    %16 = vector.shape_cast %15 : vector<1x128x128xf32> to vector<128x128xf32>
    %cst_14 = arith.constant dense<0.000000e+00> : vector<128x256xf32>
    %17 = tpu.matmul %16, %14, %cst_14 {dimension_numbers = #tpu.dot_dimension_numbers<[1], [0], [0], [1], [0, 0, 1, 1], [], []>} : vector<128x128xf32>, vector<128x256xf32>, vector<128x256xf32> -> vector<128x256xf32>
    %c1_15 = arith.constant 1 : index
    %c0_16 = arith.constant 0 : index
    %c0_17 = arith.constant 0 : index
    %18 = vector.load %arg5[%c1_15, %c0_16, %c0_17] : memref<3x128x1xf32, #tpu.memory_space<vmem>>, vector<1x128x1xf32>
    %19 = vector.shape_cast %18 : vector<1x128x1xf32> to vector<128x1xf32>
    %20 = vector.broadcast %19 : vector<128x1xf32> to vector<128x256xf32>
    %21 = arith.addf %17, %20 : vector<128x256xf32>
    %22 = math.tanh %21 : vector<128x256xf32>
    %c2 = arith.constant 2 : index
    %c0_18 = arith.constant 0 : index
    %c0_19 = arith.constant 0 : index
    %23 = vector.load %arg4[%c2, %c0_18, %c0_19] : memref<3x128x128xf32, #tpu.memory_space<vmem>>, vector<1x128x128xf32>
    %24 = vector.shape_cast %23 : vector<1x128x128xf32> to vector<128x128xf32>
    %cst_20 = arith.constant dense<0.000000e+00> : vector<128x256xf32>
    %25 = tpu.matmul %24, %22, %cst_20 {dimension_numbers = #tpu.dot_dimension_numbers<[1], [0], [0], [1], [0, 0, 1, 1], [], []>} : vector<128x128xf32>, vector<128x256xf32>, vector<128x256xf32> -> vector<128x256xf32>
    %c2_21 = arith.constant 2 : index
    %c0_22 = arith.constant 0 : index
    %c0_23 = arith.constant 0 : index
    %26 = vector.load %arg5[%c2_21, %c0_22, %c0_23] : memref<3x128x1xf32, #tpu.memory_space<vmem>>, vector<1x128x1xf32>
    %27 = vector.shape_cast %26 : vector<1x128x1xf32> to vector<128x1xf32>
    %28 = vector.broadcast %27 : vector<128x1xf32> to vector<128x256xf32>
    %29 = arith.addf %25, %28 : vector<128x256xf32>
    %30 = math.tanh %29 : vector<128x256xf32>
    %c0_24 = arith.constant 0 : index
    %c0_25 = arith.constant 0 : index
    %31 = vector.load %arg6[%c0_24, %c0_25] : memref<1x128xf32, #tpu.memory_space<vmem>>, vector<1x128xf32>
    %cst_26 = arith.constant dense<0.000000e+00> : vector<1x256xf32>
    %32 = tpu.matmul %31, %30, %cst_26 {dimension_numbers = #tpu.dot_dimension_numbers<[1], [0], [0], [1], [0, 0, 1, 1], [], []>} : vector<1x128xf32>, vector<128x256xf32>, vector<1x256xf32> -> vector<1x256xf32>
    %c0_27 = arith.constant 0 : index
    %c0_28 = arith.constant 0 : index
    %33 = vector.load %arg7[%c0_27, %c0_28] : memref<1x1xf32, #tpu.memory_space<vmem>>, vector<1x1xf32>
    %34 = vector.broadcast %33 : vector<1x1xf32> to vector<1x256xf32>
    %35 = arith.addf %32, %34 : vector<1x256xf32>
    %c0_29 = arith.constant 0 : index
    %c0_30 = arith.constant 0 : index
    %36 = vector.load %arg8[%c0_29, %c0_30] : memref<1x256xf32, #tpu.memory_space<vmem>>, vector<1x256xf32>
    tpu.vector_store %arg8[%c0_29, %c0_30], %35 {strides = array<i32>} : memref<1x256xf32, #tpu.memory_space<vmem>>, vector<1x256xf32>,
    return
  }
  func.func @transform_0(%arg0: i32) -> (i32, i32) {
    %c0_i32 = arith.constant 0 : i32
    %c0_i32_0 = arith.constant 0 : i32
    return %c0_i32, %arg0 : i32, i32
  }
  func.func @transform_1(%arg0: i32) -> (i32, i32) {
    %c0_i32 = arith.constant 0 : i32
    %c0_i32_0 = arith.constant 0 : i32
    %c0_i32_1 = arith.constant 0 : i32
    return %c0_i32, %c0_i32_0 : i32, i32
  }
  func.func @transform_2(%arg0: i32) -> (i32, i32) {
    %c0_i32 = arith.constant 0 : i32
    %c0_i32_0 = arith.constant 0 : i32
    %c0_i32_1 = arith.constant 0 : i32
    return %c0_i32, %c0_i32_0 : i32, i32
  }
  func.func @transform_3(%arg0: i32) -> (i32, i32, i32) {
    %c0_i32 = arith.constant 0 : i32
    %c0_i32_0 = arith.constant 0 : i32
    %c0_i32_1 = arith.constant 0 : i32
    %c0_i32_2 = arith.constant 0 : i32
    return %c0_i32, %c0_i32_0, %c0_i32_1 : i32, i32, i32
  }
  func.func @transform_4(%arg0: i32) -> (i32, i32, i32) {
    %c0_i32 = arith.constant 0 : i32
    %c0_i32_0 = arith.constant 0 : i32
    %c0_i32_1 = arith.constant 0 : i32
    %c0_i32_2 = arith.constant 0 : i32
    return %c0_i32, %c0_i32_0, %c0_i32_1 : i32, i32, i32
  }
  func.func @transform_5(%arg0: i32) -> (i32, i32) {
    %c0_i32 = arith.constant 0 : i32
    %c0_i32_0 = arith.constant 0 : i32
    %c0_i32_1 = arith.constant 0 : i32
    return %c0_i32, %c0_i32_0 : i32, i32
  }
  func.func @transform_6(%arg0: i32) -> (i32, i32) {
    %c0_i32 = arith.constant 0 : i32
    %c0_i32_0 = arith.constant 0 : i32
    %c0_i32_1 = arith.constant 0 : i32
    return %c0_i32, %c0_i32_0 : i32, i32
  }
  func.func @transform_7(%arg0: i32) -> (i32, i32) {
    %c0_i32 = arith.constant 0 : i32
    %c0_i32_0 = arith.constant 0 : i32
    return %c0_i32, %arg0 : i32, i32
  }
}

</mosaic_0001>

<llo_original>
// kernel: tpu_custom_call.1
$region0: #{tpu_custom_call.1}
  #allocation0 [shape = 'u32[]', space=smem, size = 0x4, offset = 0x4, fixed_abs, tag = 'smem constant byte address 0x4 - core index']
  #allocation1 [shape = 'u32[144,128]{1,0:T(1,128)}', space=vmem, size = 0x12000, scoped, tag = 'internal scratch']
  #allocation2 [shape = 'f32[1,1]{1,0:T(1,128)S(1)}', space=vmem, size = 0x200, scoped, tag = 'scoped memory for tpu_custom_call.1']
  %s0 = inlined_call_operand.hbm [shape: f32[4,256], index: 0, kind: input, shape index: {}]
  %s1 = inlined_call_operand.hbm [shape: f32[128,4], index: 1, kind: input, shape index: {}]
  %s2 = inlined_call_operand.hbm [shape: f32[128,1], index: 2, kind: input, shape index: {}]
  %s3 = inlined_call_operand.hbm [shape: f32[3,128,128], index: 3, kind: input, shape index: {}]
  %s4 = inlined_call_operand.hbm [shape: f32[3,128,1], index: 4, kind: input, shape index: {}]
  %s5 = inlined_call_operand.hbm [shape: f32[1,128], index: 5, kind: input, shape index: {}]
  %s6 = inlined_call_operand.<no memory space> [shape: f32[1,1], index: 6, kind: input, shape index: {}]
  %s7 = inlined_call_operand.hbm [shape: f32[1,256], index: 7, kind: output, shape index: {}]
  %s8 = sld [smem:[#allocation0]]
  $region62: #{tpu_custom_call.1} parent=0
    _
  %s10 = ssub.s32 1, %s8
  %s11 = scalar_select 0, %s10, %s8
  %v12 = vstv %s6
  %13 = vst [vmem:[#allocation2] sm:$0x1] %v12
  $region1: #{tpu_custom_call.1} parent=0
    #allocation3 [shape = 'u8[4096]{0}', space=vmem, size = 0x1000, scoped, tag = 'input window, operand 0, single buffered']
    #allocation4 [shape = 's32[1]{0}', space=sflag, size = 0x4, scoped, tag = 'scoped memory for tpu_custom_call.1']
    #allocation5 [shape = 's32[1]{0}', space=sflag, size = 0x4, scoped, tag = 'scoped memory for tpu_custom_call.1']
    #allocation6 [shape = 'u8[65536]{0}', space=vmem, size = 0x10000, scoped, tag = 'input window, operand 1, single buffered']
    #allocation7 [shape = 's32[1]{0}', space=sflag, size = 0x4, scoped, tag = 'scoped memory for tpu_custom_call.1']
    #allocation8 [shape = 'u8[65536]{0}', space=vmem, size = 0x10000, scoped, tag = 'input window, operand 2, single buffered']
    #allocation9 [shape = 'u8[196608]{0}', space=vmem, size = 0x30000, scoped, tag = 'input window, operand 3, single buffered']
    #allocation10 [shape = 's32[1]{0}', space=sflag, size = 0x4, scoped, tag = 'scoped memory for tpu_custom_call.1']
    #allocation11 [shape = 'u8[196608]{0}', space=vmem, size = 0x30000, scoped, tag = 'input window, operand 4, single buffered']
    #allocation12 [shape = 'u8[512]{0}', space=vmem, size = 0x400, scoped, tag = 'input window, operand 5, single buffered']
    #allocation13 [shape = 's32[1]{0}', space=sflag, size = 0x4, scoped, tag = 'scoped memory for tpu_custom_call.1']
    #allocation14 [shape = 'u8[1024]{0}', space=vmem, size = 0x400, scoped, tag = 'output window, operand 0, single buffered']
    %14 = vsyncpa [#allocation4], 0
    %15 = vsyncpa [#allocation7], 0
    %16 = vsyncpa [#allocation10], 0
    %17 = vsyncpa [#allocation13], 0
    %18 = vsyncpa [#allocation5], 0
    // Predicated region
    $region2: #{tpu_custom_call.1} parent=1 // pred_check
      _
    $region3: #{tpu_custom_call.1} parent=1 // pred_check_branch
      %20 = sbr.rel (0) target = $region5
    $region4: #{tpu_custom_call.1} parent=1 // pred_region
      %s22 = ssub.s32 128, 128
      %23 = vsyncadd [#allocation4], %s22
      %s25 = sshll.u32 [#allocation3], 4
      %s26 = int_to_ptr.vmem [resolvable:$true] %s25
      %28 = dma.hbm_to_vmem [thread:$0]  %s0, 128, %s26, [#allocation4]
    $region5: #{tpu_custom_call.1} parent=1 // pred_fallthru
      _
    // Predicated region
    $region6: #{tpu_custom_call.1} parent=1 // pred_check
      _
    $region7: #{tpu_custom_call.1} parent=1 // pred_check_branch
      %30 = sbr.rel (0) target = $region9
    $region8: #{tpu_custom_call.1} parent=1 // pred_region
      %s32 = ssub.s32 2048, 2048
      %33 = vsyncadd [#allocation7], %s32
      %s34 = sshll.u32 [#allocation6], 4
      %s35 = int_to_ptr.vmem [resolvable:$true] %s34
      %40 = dma.hbm_to_vmem [thread:$0]  %s1, 2048, %s35, [#allocation7], 128, 128, 8
    $region9: #{tpu_custom_call.1} parent=1 // pred_fallthru
      _
    // Predicated region
    $region10: #{tpu_custom_call.1} parent=1 // pred_check
      _
    $region11: #{tpu_custom_call.1} parent=1 // pred_check_branch
      %42 = sbr.rel (0) target = $region13
    $region12: #{tpu_custom_call.1} parent=1 // pred_region
      %s44 = ssub.s32 2048, 2048
      %45 = vsyncadd [#allocation7], %s44
      %s46 = sshll.u32 [#allocation8], 4
      %s47 = int_to_ptr.vmem [resolvable:$true] %s46
      %52 = dma.hbm_to_vmem [thread:$0]  %s2, 2048, %s47, [#allocation7], 128, 128, 8
    $region13: #{tpu_custom_call.1} parent=1 // pred_fallthru
      _
    // Predicated region
    $region14: #{tpu_custom_call.1} parent=1 // pred_check
      _
    $region15: #{tpu_custom_call.1} parent=1 // pred_check_branch
      %54 = sbr.rel (0) target = $region17
    $region16: #{tpu_custom_call.1} parent=1 // pred_region
      %s56 = ssub.s32 6144, 6144
      %57 = vsyncadd [#allocation10], %s56
      %s58 = sshll.u32 [#allocation9], 4
      %s59 = int_to_ptr.vmem [resolvable:$true] %s58
      %64 = dma.hbm_to_vmem [thread:$0]  %s3, 6144, %s59, [#allocation10], 128, 128, 8
    $region17: #{tpu_custom_call.1} parent=1 // pred_fallthru
      _
    // Predicated region
    $region18: #{tpu_custom_call.1} parent=1 // pred_check
      _
    $region19: #{tpu_custom_call.1} parent=1 // pred_check_branch
      %66 = sbr.rel (0) target = $region21
    $region20: #{tpu_custom_call.1} parent=1 // pred_region
      %s68 = ssub.s32 6144, 6144
      %69 = vsyncadd [#allocation10], %s68
      %s70 = sshll.u32 [#allocation11], 4
      %s71 = int_to_ptr.vmem [resolvable:$true] %s70
      %76 = dma.hbm_to_vmem [thread:$0]  %s4, 6144, %s71, [#allocation10], 128, 128, 8
    $region21: #{tpu_custom_call.1} parent=1 // pred_fallthru
      _
    // Predicated region
    $region22: #{tpu_custom_call.1} parent=1 // pred_check
      _
    $region23: #{tpu_custom_call.1} parent=1 // pred_check_branch
      %78 = sbr.rel (0) target = $region25
    $region24: #{tpu_custom_call.1} parent=1 // pred_region
      %s80 = ssub.s32 16, 16
      %81 = vsyncadd [#allocation13], %s80
      %s83 = sshll.u32 [#allocation12], 4
      %s84 = int_to_ptr.vmem [resolvable:$true] %s83
      %86 = dma.hbm_to_vmem [thread:$0]  %s5, 16, %s84, [#allocation13]
    $region25: #{tpu_custom_call.1} parent=1 // pred_fallthru
      _
    // Predicated region
    $region26: #{tpu_custom_call.1} parent=1 // pred_check
      _
    $region27: #{tpu_custom_call.1} parent=1 // pred_check_branch
      %88 = sbr.rel (0) target = $region29
    $region28: #{tpu_custom_call.1} parent=1 // pred_region
      _
    $region29: #{tpu_custom_call.1} parent=1 // pred_fallthru
      _
    // Predicated region
    $region30: #{tpu_custom_call.1} parent=1 // pred_check
      _
    $region31: #{tpu_custom_call.1} parent=1 // pred_check_branch
      %90 = sbr.rel (0) target = $region33
    $region32: #{tpu_custom_call.1} parent=1 // pred_region
      %91 = dma.done [#allocation4], 128
    $region33: #{tpu_custom_call.1} parent=1 // pred_fallthru
      _
    // Predicated region
    $region34: #{tpu_custom_call.1} parent=1 // pred_check
      _
    $region35: #{tpu_custom_call.1} parent=1 // pred_check_branch
      %93 = sbr.rel (0) target = $region37
    $region36: #{tpu_custom_call.1} parent=1 // pred_region
      %94 = dma.done [#allocation7], 2048
    $region37: #{tpu_custom_call.1} parent=1 // pred_fallthru
      _
    // Predicated region
    $region38: #{tpu_custom_call.1} parent=1 // pred_check
      _
    $region39: #{tpu_custom_call.1} parent=1 // pred_check_branch
      %96 = sbr.rel (0) target = $region41
    $region40: #{tpu_custom_call.1} parent=1 // pred_region
      %97 = dma.done [#allocation7], 2048
    $region41: #{tpu_custom_call.1} parent=1 // pred_fallthru
      _
    // Predicated region
    $region42: #{tpu_custom_call.1} parent=1 // pred_check
      _
    $region43: #{tpu_custom_call.1} parent=1 // pred_check_branch
      %99 = sbr.rel (0) target = $region45
    $region44: #{tpu_custom_call.1} parent=1 // pred_region
      %100 = dma.done [#allocation10], 6144
    $region45: #{tpu_custom_call.1} parent=1 // pred_fallthru
      _
    // Predicated region
    $region46: #{tpu_custom_call.1} parent=1 // pred_check
      _
    $region47: #{tpu_custom_call.1} parent=1 // pred_check_branch
      %102 = sbr.rel (0) target = $region49
    $region48: #{tpu_custom_call.1} parent=1 // pred_region
      %103 = dma.done [#allocation10], 6144
    $region49: #{tpu_custom_call.1} parent=1 // pred_fallthru
      _
    // Predicated region
    $region50: #{tpu_custom_call.1} parent=1 // pred_check
      _
    $region51: #{tpu_custom_call.1} parent=1 // pred_check_branch
      %105 = sbr.rel (0) target = $region53
    $region52: #{tpu_custom_call.1} parent=1 // pred_region
      %106 = dma.done [#allocation13], 16
    $region53: #{tpu_custom_call.1} parent=1 // pred_fallthru
      _
    %v107 = vld [vmem:[#allocation6] sm:$0xff]
    %v108 = vld [vmem:[#allocation6 + $0x8] sm:$0xff]
    %v109 = vld [vmem:[#allocation6 + $0x10] sm:$0xff]
    %v110 = vld [vmem:[#allocation6 + $0x18] sm:$0xff]
    %v111 = vld [vmem:[#allocation6 + $0x20] sm:$0xff]
    %v112 = vld [vmem:[#allocation6 + $0x28] sm:$0xff]
    %v113 = vld [vmem:[#allocation6 + $0x30] sm:$0xff]
    %v114 = vld [vmem:[#allocation6 + $0x38] sm:$0xff]
    %v115 = vld [vmem:[#allocation6 + $0x40] sm:$0xff]
    %v116 = vld [vmem:[#allocation6 + $0x48] sm:$0xff]
    %v117 = vld [vmem:[#allocation6 + $0x50] sm:$0xff]
    %v118 = vld [vmem:[#allocation6 + $0x58] sm:$0xff]
    %v119 = vld [vmem:[#allocation6 + $0x60] sm:$0xff]
    %v120 = vld [vmem:[#allocation6 + $0x68] sm:$0xff]
    %v121 = vld [vmem:[#allocation6 + $0x70] sm:$0xff]
    %v122 = vld [vmem:[#allocation6 + $0x78] sm:$0xff]
    %v123 = vld [vmem:[#allocation3] sm:$0xff]
    %v124 = vld [vmem:[#allocation8] sm:$0xff]
    %v125 = vld [vmem:[#allocation8 + $0x8] sm:$0xff]
    %v126 = vld [vmem:[#allocation8 + $0x10] sm:$0xff]
    %v127 = vld [vmem:[#allocation8 + $0x18] sm:$0xff]
    %v128 = vld [vmem:[#allocation8 + $0x20] sm:$0xff]
    %v129 = vld [vmem:[#allocation8 + $0x28] sm:$0xff]
    %v130 = vld [vmem:[#allocation8 + $0x30] sm:$0xff]
    %v131 = vld [vmem:[#allocation8 + $0x38] sm:$0xff]
    %v132 = vld [vmem:[#allocation8 + $0x40] sm:$0xff]
    %v133 = vld [vmem:[#allocation8 + $0x48] sm:$0xff]
    %v134 = vld [vmem:[#allocation8 + $0x50] sm:$0xff]
    %v135 = vld [vmem:[#allocation8 + $0x58] sm:$0xff]
    %v136 = vld [vmem:[#allocation8 + $0x60] sm:$0xff]
    %v137 = vld [vmem:[#allocation8 + $0x68] sm:$0xff]
    %v138 = vld [vmem:[#allocation8 + $0x70] sm:$0xff]
    %v139 = vld [vmem:[#allocation8 + $0x78] sm:$0xff]
    %141 = vset.pattern.permute.xlu0 0
    %142 = vperm.xlu0 %141, %v124
    %v143 = vpop.permute.xlu0 %142
    %146 = vset.pattern.permute.xlu0 0
    %147 = vperm.xlu0 %146, %v125
    %v148 = vpop.permute.xlu0 %147
    %151 = vset.pattern.permute.xlu0 0
    %152 = vperm.xlu0 %151, %v126
    %v153 = vpop.permute.xlu0 %152
    %156 = vset.pattern.permute.xlu0 0
    %157 = vperm.xlu0 %156, %v127
    %v158 = vpop.permute.xlu0 %157
    %161 = vset.pattern.permute.xlu0 0
    %162 = vperm.xlu0 %161, %v128
    %v163 = vpop.permute.xlu0 %162
    %166 = vset.pattern.permute.xlu0 0
    %167 = vperm.xlu0 %166, %v129
    %v168 = vpop.permute.xlu0 %167
    %171 = vset.pattern.permute.xlu0 0
    %172 = vperm.xlu0 %171, %v130
    %v173 = vpop.permute.xlu0 %172
    %176 = vset.pattern.permute.xlu0 0
    %177 = vperm.xlu0 %176, %v131
    %v178 = vpop.permute.xlu0 %177
    %181 = vset.pattern.permute.xlu0 0
    %182 = vperm.xlu0 %181, %v132
    %v183 = vpop.permute.xlu0 %182
    %186 = vset.pattern.permute.xlu0 0
    %187 = vperm.xlu0 %186, %v133
    %v188 = vpop.permute.xlu0 %187
    %191 = vset.pattern.permute.xlu0 0
    %192 = vperm.xlu0 %191, %v134
    %v193 = vpop.permute.xlu0 %192
    %196 = vset.pattern.permute.xlu0 0
    %197 = vperm.xlu0 %196, %v135
    %v198 = vpop.permute.xlu0 %197
    %201 = vset.pattern.permute.xlu0 0
    %202 = vperm.xlu0 %201, %v136
    %v203 = vpop.permute.xlu0 %202
    %206 = vset.pattern.permute.xlu0 0
    %207 = vperm.xlu0 %206, %v137
    %v208 = vpop.permute.xlu0 %207
    %211 = vset.pattern.permute.xlu0 0
    %212 = vperm.xlu0 %211, %v138
    %v213 = vpop.permute.xlu0 %212
    %216 = vset.pattern.permute.xlu0 0
    %217 = vperm.xlu0 %216, %v139
    %v218 = vpop.permute.xlu0 %217
    %v221 = vcombine.high %v123, %v123
    %vm222 = vcmask 31744
    %v224 = vsel %vm222, %v107, 0
    %v227 = vsel %vm222, %v108, 0
    %v230 = vsel %vm222, %v109, 0
    %v233 = vsel %vm222, %v110, 0
    %v236 = vsel %vm222, %v111, 0
    %v239 = vsel %vm222, %v112, 0
    %v242 = vsel %vm222, %v113, 0
    %v245 = vsel %vm222, %v114, 0
    %v248 = vsel %vm222, %v115, 0
    %v251 = vsel %vm222, %v116, 0
    %v254 = vsel %vm222, %v117, 0
    %v257 = vsel %vm222, %v118, 0
    %v260 = vsel %vm222, %v119, 0
    %v263 = vsel %vm222, %v120, 0
    %v266 = vsel %vm222, %v121, 0
    %v269 = vsel %vm222, %v122, 0
    %vm271 = vcmask 1043456
    %v272 = vsel %vm271, %v123, 0
    %v274 = vsel %vm271, %v221, 0
    %276 = vmatprep.subr.mxu0 %v274
    %277 = vmatpush1.msra.mxu0 %v272
    %278 = vmatprep.subr.mxu0 0.0
    %279 = vmatpush1.msra.mxu0 0.0
    %280 = vmatprep.subr.mxu0 0.0
    %281 = vmatpush1.msra.mxu0 0.0
    %282 = vmatprep.subr.mxu0 0.0
    %283 = vmatpush1.msra.mxu0 0.0
    %284 = vmatprep.subr.mxu0 0.0
    %285 = vmatpush1.msra.mxu0 0.0
    %286 = vmatprep.subr.mxu0 0.0
    %287 = vmatpush1.msra.mxu0 0.0
    %288 = vmatprep.subr.mxu0 0.0
    %289 = vmatpush1.msra.mxu0 0.0
    %290 = vmatprep.subr.mxu0 0.0
    %291 = vmatpush1.msra.mxu0 0.0
    %292 = vmatprep.subr.mxu0 0.0
    %293 = vmatpush1.msra.mxu0 0.0
    %294 = vmatprep.subr.mxu0 0.0
    %295 = vmatpush1.msra.mxu0 0.0
    %296 = vmatprep.subr.mxu0 0.0
    %297 = vmatpush1.msra.mxu0 0.0
    %298 = vmatprep.subr.mxu0 0.0
    %299 = vmatpush1.msra.mxu0 0.0
    %300 = vmatprep.subr.mxu0 0.0
    %301 = vmatpush1.msra.mxu0 0.0
    %302 = vmatprep.subr.mxu0 0.0
    %303 = vmatpush1.msra.mxu0 0.0
    %304 = vmatprep.subr.mxu0 0.0
    %305 = vmatpush1.msra.mxu0 0.0
    %306 = vmatprep.subr.mxu0 0.0
    %307 = vmatpush1.msra.mxu0 0.0
    %308 = vmatprep.subr.mxu0 0.0
    %309 = vmatpush1.msra.mxu0 0.0
    %310 = vmatprep.subr.mxu0 0.0
    %311 = vmatpush1.msra.mxu0 0.0
    %312 = vmatprep.subr.mxu0 0.0
    %313 = vmatpush1.msra.mxu0 0.0
    %314 = vmatprep.subr.mxu0 0.0
    %315 = vmatpush1.msra.mxu0 0.0
    %316 = vmatprep.subr.mxu0 0.0
    %317 = vmatpush1.msra.mxu0 0.0
    %318 = vmatprep.subr.mxu0 0.0
    %319 = vmatpush1.msra.mxu0 0.0
    %320 = vmatprep.subr.mxu0 0.0
    %321 = vmatpush1.msra.mxu0 0.0
    %322 = vmatprep.subr.mxu0 0.0
    %323 = vmatpush1.msra.mxu0 0.0
    %324 = vmatprep.subr.mxu0 0.0
    %325 = vmatpush1.msra.mxu0 0.0
    %326 = vmatprep.subr.mxu0 0.0
    %327 = vmatpush1.msra.mxu0 0.0
    %328 = vmatprep.subr.mxu0 0.0
    %329 = vmatpush1.msra.mxu0 0.0
    %330 = vmatprep.subr.mxu0 0.0
    %331 = vmatpush1.msra.mxu0 0.0
    %332 = vmatprep.subr.mxu0 0.0
    %333 = vmatpush1.msra.mxu0 0.0
    %334 = vmatprep.subr.mxu0 0.0
    %335 = vmatpush1.msra.mxu0 0.0
    %336 = vmatprep.subr.mxu0 0.0
    %337 = vmatpush1.msra.mxu0 0.0
    %338 = vmatprep.subr.mxu0 0.0
    %339 = vmatpush1.msra.mxu0 0.0
    %340 = vmatprep.mubr.f32.mxu0 0.0
    %341 = vmatmul.mubr.f32.gmra.mrb[0].mxu0 %v224
    %v342 = vpop.f32.mrb[0].mxu0
    %v343 = vadd.f32 %v143, %v342
    %v344 = vpop.f32.mrb[0].mxu0
    %v345 = vadd.f32 %v143, %v344
    %346 = vmatprep.mubr.f32.mxu0 0.0
    %347 = vmatmul.mubr.f32.gmra.mrb[0].mxu0 %v227
    %v348 = vpop.f32.mrb[0].mxu0
    %v349 = vadd.f32 %v148, %v348
    %v350 = vpop.f32.mrb[0].mxu0
    %v351 = vadd.f32 %v148, %v350
    %352 = vmatprep.mubr.f32.mxu0 0.0
    %353 = vmatmul.mubr.f32.gmra.mrb[0].mxu0 %v230
    %v354 = vpop.f32.mrb[0].mxu0
    %v355 = vadd.f32 %v153, %v354
    %v356 = vpop.f32.mrb[0].mxu0
    %v357 = vadd.f32 %v153, %v356
    %358 = vmatprep.mubr.f32.mxu0 0.0
    %359 = vmatmul.mubr.f32.gmra.mrb[0].mxu0 %v233
    %v360 = vpop.f32.mrb[0].mxu0
    %v361 = vadd.f32 %v158, %v360
    %v362 = vpop.f32.mrb[0].mxu0
    %v363 = vadd.f32 %v158, %v362
    %364 = vmatprep.mubr.f32.mxu0 0.0
    %365 = vmatmul.mubr.f32.gmra.mrb[0].mxu0 %v236
    %v366 = vpop.f32.mrb[0].mxu0
    %v367 = vadd.f32 %v163, %v366
    %v368 = vpop.f32.mrb[0].mxu0
    %v369 = vadd.f32 %v163, %v368
    %370 = vmatprep.mubr.f32.mxu0 0.0
    %371 = vmatmul.mubr.f32.gmra.mrb[0].mxu0 %v239
    %v372 = vpop.f32.mrb[0].mxu0
    %v373 = vadd.f32 %v168, %v372
    %v374 = vpop.f32.mrb[0].mxu0
    %v375 = vadd.f32 %v168, %v374
    %376 = vmatprep.mubr.f32.mxu0 0.0
    %377 = vmatmul.mubr.f32.gmra.mrb[0].mxu0 %v242
    %v378 = vpop.f32.mrb[0].mxu0
    %v379 = vadd.f32 %v173, %v378
    %v380 = vpop.f32.mrb[0].mxu0
    %v381 = vadd.f32 %v173, %v380
    %382 = vmatprep.mubr.f32.mxu0 0.0
    %383 = vmatmul.mubr.f32.gmra.mrb[0].mxu0 %v245
    %v384 = vpop.f32.mrb[0].mxu0
    %v385 = vadd.f32 %v178, %v384
    %v386 = vpop.f32.mrb[0].mxu0
    %v387 = vadd.f32 %v178, %v386
    %388 = vmatprep.mubr.f32.mxu0 0.0
    %389 = vmatmul.mubr.f32.gmra.mrb[0].mxu0 %v248
    %v390 = vpop.f32.mrb[0].mxu0
    %v391 = vadd.f32 %v183, %v390
    %v392 = vpop.f32.mrb[0].mxu0
    %v393 = vadd.f32 %v183, %v392
    %394 = vmatprep.mubr.f32.mxu0 0.0
    %395 = vmatmul.mubr.f32.gmra.mrb[0].mxu0 %v251
    %v396 = vpop.f32.mrb[0].mxu0
    %v397 = vadd.f32 %v188, %v396
    %v398 = vpop.f32.mrb[0].mxu0
    %v399 = vadd.f32 %v188, %v398
    %400 = vmatprep.mubr.f32.mxu0 0.0
    %401 = vmatmul.mubr.f32.gmra.mrb[0].mxu0 %v254
    %v402 = vpop.f32.mrb[0].mxu0
    %v403 = vadd.f32 %v193, %v402
    %v404 = vpop.f32.mrb[0].mxu0
    %v405 = vadd.f32 %v193, %v404
    %406 = vmatprep.mubr.f32.mxu0 0.0
    %407 = vmatmul.mubr.f32.gmra.mrb[0].mxu0 %v257
    %v408 = vpop.f32.mrb[0].mxu0
    %v409 = vadd.f32 %v198, %v408
    %v410 = vpop.f32.mrb[0].mxu0
    %v411 = vadd.f32 %v198, %v410
    %412 = vmatprep.mubr.f32.mxu0 0.0
    %413 = vmatmul.mubr.f32.gmra.mrb[0].mxu0 %v260
    %v414 = vpop.f32.mrb[0].mxu0
    %v415 = vadd.f32 %v203, %v414
    %v416 = vpop.f32.mrb[0].mxu0
    %v417 = vadd.f32 %v203, %v416
    %418 = vmatprep.mubr.f32.mxu0 0.0
    %419 = vmatmul.mubr.f32.gmra.mrb[0].mxu0 %v263
    %v420 = vpop.f32.mrb[0].mxu0
    %v421 = vadd.f32 %v208, %v420
    %v422 = vpop.f32.mrb[0].mxu0
    %v423 = vadd.f32 %v208, %v422
    %424 = vmatprep.mubr.f32.mxu0 0.0
    %425 = vmatmul.mubr.f32.gmra.mrb[0].mxu0 %v266
    %v426 = vpop.f32.mrb[0].mxu0
    %v427 = vadd.f32 %v213, %v426
    %v428 = vpop.f32.mrb[0].mxu0
    %v429 = vadd.f32 %v213, %v428
    %430 = vmatprep.mubr.f32.mxu0 0.0
    %431 = vmatmul.mubr.f32.gmra.mrb[0].mxu0 %v269
    %v432 = vpop.f32.mrb[0].mxu0
    %v433 = vadd.f32 %v218, %v432
    %v434 = vpop.f32.mrb[0].mxu0
    %v435 = vadd.f32 %v218, %v434
    %436 = vdwg.mxu0
    %v437 = vtanh.pop %v343
    %v438 = vtanh.pop %v345
    %v439 = vtanh.pop %v349
    %v440 = vtanh.pop %v351
    %v441 = vtanh.pop %v355
    %v442 = vtanh.pop %v357
    %v443 = vtanh.pop %v361
    %v444 = vtanh.pop %v363
    %v445 = vtanh.pop %v367
    %v446 = vtanh.pop %v369
    %v447 = vtanh.pop %v373
    %v448 = vtanh.pop %v375
    %v449 = vtanh.pop %v379
    %v450 = vtanh.pop %v381
    %v451 = vtanh.pop %v385
    %v452 = vtanh.pop %v387
    %v453 = vtanh.pop %v391
    %v454 = vtanh.pop %v393
    %v455 = vtanh.pop %v397
    %v456 = vtanh.pop %v399
    %v457 = vtanh.pop %v403
    %v458 = vtanh.pop %v405
    %v459 = vtanh.pop %v409
    %v460 = vtanh.pop %v411
    %v461 = vtanh.pop %v415
    %v462 = vtanh.pop %v417
    %v463 = vtanh.pop %v421
    %v464 = vtanh.pop %v423
    %v465 = vtanh.pop %v427
    %v466 = vtanh.pop %v429
    %v467 = vtanh.pop %v433
    %v468 = vtanh.pop %v435
    %v469 = vld [vmem:[#allocation9] sm:$0xff]
    %v470 = vld [vmem:[#allocation9 + $0x8] sm:$0xff]
    %v471 = vld [vmem:[#allocation9 + $0x10] sm:$0xff]
    %v472 = vld [vmem:[#allocation9 + $0x18] sm:$0xff]
    %v473 = vld [vmem:[#allocation9 + $0x20] sm:$0xff]
    %v474 = vld [vmem:[#allocation9 + $0x28] sm:$0xff]
    %v475 = vld [vmem:[#allocation9 + $0x30] sm:$0xff]
    %v476 = vld [vmem:[#allocation9 + $0x38] sm:$0xff]
    %v477 = vld [vmem:[#allocation9 + $0x40] sm:$0xff]
    %v478 = vld [vmem:[#allocation9 + $0x48] sm:$0xff]
    %v479 = vld [vmem:[#allocation9 + $0x50] sm:$0xff]
    %v480 = vld [vmem:[#allocation9 + $0x58] sm:$0xff]
    %v481 = vld [vmem:[#allocation9 + $0x60] sm:$0xff]
    %v482 = vld [vmem:[#allocation9 + $0x68] sm:$0xff]
    %v483 = vld [vmem:[#allocation9 + $0x70] sm:$0xff]
    %v484 = vld [vmem:[#allocation9 + $0x78] sm:$0xff]
    %v485 = vld [vmem:[#allocation11] sm:$0xff]
    %v486 = vld [vmem:[#allocation11 + $0x8] sm:$0xff]
    %v487 = vld [vmem:[#allocation11 + $0x10] sm:$0xff]
    %v488 = vld [vmem:[#allocation11 + $0x18] sm:$0xff]
    %v489 = vld [vmem:[#allocation11 + $0x20] sm:$0xff]
    %v490 = vld [vmem:[#allocation11 + $0x28] sm:$0xff]
    %v491 = vld [vmem:[#allocation11 + $0x30] sm:$0xff]
    %v492 = vld [vmem:[#allocation11 + $0x38] sm:$0xff]
    %v493 = vld [vmem:[#allocation11 + $0x40] sm:$0xff]
    %v494 = vld [vmem:[#allocation11 + $0x48] sm:$0xff]
    %v495 = vld [vmem:[#allocation11 + $0x50] sm:$0xff]
    %v496 = vld [vmem:[#allocation11 + $0x58] sm:$0xff]
    %v497 = vld [vmem:[#allocation11 + $0x60] sm:$0xff]
    %v498 = vld [vmem:[#allocation11 + $0x68] sm:$0xff]
    %v499 = vld [vmem:[#allocation11 + $0x70] sm:$0xff]
    %v500 = vld [vmem:[#allocation11 + $0x78] sm:$0xff]
    %502 = vset.pattern.permute.xlu0 0
    %503 = vperm.xlu0 %502, %v485
    %v504 = vpop.permute.xlu0 %503
    %507 = vset.pattern.permute.xlu0 0
    %508 = vperm.xlu0 %507, %v486
    %v509 = vpop.permute.xlu0 %508
    %512 = vset.pattern.permute.xlu0 0
    %513 = vperm.xlu0 %512, %v487
    %v514 = vpop.permute.xlu0 %513
    %517 = vset.pattern.permute.xlu0 0
    %518 = vperm.xlu0 %517, %v488
    %v519 = vpop.permute.xlu0 %518
    %522 = vset.pattern.permute.xlu0 0
    %523 = vperm.xlu0 %522, %v489
    %v524 = vpop.permute.xlu0 %523
    %527 = vset.pattern.permute.xlu0 0
    %528 = vperm.xlu0 %527, %v490
    %v529 = vpop.permute.xlu0 %528
    %532 = vset.pattern.permute.xlu0 0
    %533 = vperm.xlu0 %532, %v491
    %v534 = vpop.permute.xlu0 %533
    %537 = vset.pattern.permute.xlu0 0
    %538 = vperm.xlu0 %537, %v492
    %v539 = vpop.permute.xlu0 %538
    %542 = vset.pattern.permute.xlu0 0
    %543 = vperm.xlu0 %542, %v493
    %v544 = vpop.permute.xlu0 %543
    %547 = vset.pattern.permute.xlu0 0
    %548 = vperm.xlu0 %547, %v494
    %v549 = vpop.permute.xlu0 %548
    %552 = vset.pattern.permute.xlu0 0
    %553 = vperm.xlu0 %552, %v495
    %v554 = vpop.permute.xlu0 %553
    %557 = vset.pattern.permute.xlu0 0
    %558 = vperm.xlu0 %557, %v496
    %v559 = vpop.permute.xlu0 %558
    %562 = vset.pattern.permute.xlu0 0
    %563 = vperm.xlu0 %562, %v497
    %v564 = vpop.permute.xlu0 %563
    %567 = vset.pattern.permute.xlu0 0
    %568 = vperm.xlu0 %567, %v498
    %v569 = vpop.permute.xlu0 %568
    %572 = vset.pattern.permute.xlu0 0
    %573 = vperm.xlu0 %572, %v499
    %v574 = vpop.permute.xlu0 %573
    %577 = vset.pattern.permute.xlu0 0
    %578 = vperm.xlu0 %577, %v500
    %v579 = vpop.permute.xlu0 %578
    %581 = vmatprep.subr.mxu0 %v438
    %582 = vmatpush1.msra.mxu0 %v437
    %583 = vmatprep.subr.mxu0 %v440
    %584 = vmatpush1.msra.mxu0 %v439
    %585 = vmatprep.subr.mxu0 %v442
    %586 = vmatpush1.msra.mxu0 %v441
    %587 = vmatprep.subr.mxu0 %v444
    %588 = vmatpush1.msra.mxu0 %v443
    %589 = vmatprep.subr.mxu0 %v446
    %590 = vmatpush1.msra.mxu0 %v445
    %591 = vmatprep.subr.mxu0 %v448
    %592 = vmatpush1.msra.mxu0 %v447
    %593 = vmatprep.subr.mxu0 %v450
    %594 = vmatpush1.msra.mxu0 %v449
    %595 = vmatprep.subr.mxu0 %v452
    %596 = vmatpush1.msra.mxu0 %v451
    %597 = vmatprep.subr.mxu0 %v454
    %598 = vmatpush1.msra.mxu0 %v453
    %599 = vmatprep.subr.mxu0 %v456
    %600 = vmatpush1.msra.mxu0 %v455
    %601 = vmatprep.subr.mxu0 %v458
    %602 = vmatpush1.msra.mxu0 %v457
    %603 = vmatprep.subr.mxu0 %v460
    %604 = vmatpush1.msra.mxu0 %v459
    %605 = vmatprep.subr.mxu0 %v462
    %606 = vmatpush1.msra.mxu0 %v461
    %607 = vmatprep.subr.mxu0 %v464
    %608 = vmatpush1.msra.mxu0 %v463
    %609 = vmatprep.subr.mxu0 %v466
    %610 = vmatpush1.msra.mxu0 %v465
    %611 = vmatprep.subr.mxu0 %v468
    %612 = vmatpush1.msra.mxu0 %v467
    %613 = vmatprep.subr.mxu0 0.0
    %614 = vmatpush1.msra.mxu0 0.0
    %615 = vmatprep.subr.mxu0 0.0
    %616 = vmatpush1.msra.mxu0 0.0
    %617 = vmatprep.subr.mxu0 0.0
    %618 = vmatpush1.msra.mxu0 0.0
    %619 = vmatprep.subr.mxu0 0.0
    %620 = vmatpush1.msra.mxu0 0.0
    %621 = vmatprep.subr.mxu0 0.0
    %622 = vmatpush1.msra.mxu0 0.0
    %623 = vmatprep.subr.mxu0 0.0
    %624 = vmatpush1.msra.mxu0 0.0
    %625 = vmatprep.subr.mxu0 0.0
    %626 = vmatpush1.msra.mxu0 0.0
    %627 = vmatprep.subr.mxu0 0.0
    %628 = vmatpush1.msra.mxu0 0.0
    %629 = vmatprep.subr.mxu0 0.0
    %630 = vmatpush1.msra.mxu0 0.0
    %631 = vmatprep.subr.mxu0 0.0
    %632 = vmatpush1.msra.mxu0 0.0
    %633 = vmatprep.subr.mxu0 0.0
    %634 = vmatpush1.msra.mxu0 0.0
    %635 = vmatprep.subr.mxu0 0.0
    %636 = vmatpush1.msra.mxu0 0.0
    %637 = vmatprep.subr.mxu0 0.0
    %638 = vmatpush1.msra.mxu0 0.0
    %639 = vmatprep.subr.mxu0 0.0
    %640 = vmatpush1.msra.mxu0 0.0
    %641 = vmatprep.subr.mxu0 0.0
    %642 = vmatpush1.msra.mxu0 0.0
    %643 = vmatprep.subr.mxu0 0.0
    %644 = vmatpush1.msra.mxu0 0.0
    %645 = vmatprep.mubr.f32.mxu0 0.0
    %646 = vmatmul.mubr.f32.gmra.mrb[0].mxu0 %v469
    %v647 = vpop.f32.mrb[0].mxu0
    %v648 = vadd.f32 %v504, %v647
    %v649 = vpop.f32.mrb[0].mxu0
    %v650 = vadd.f32 %v504, %v649
    %651 = vmatprep.mubr.f32.mxu0 0.0
    %652 = vmatmul.mubr.f32.gmra.mrb[0].mxu0 %v470
    %v653 = vpop.f32.mrb[0].mxu0
    %v654 = vadd.f32 %v509, %v653
    %v655 = vpop.f32.mrb[0].mxu0
    %v656 = vadd.f32 %v509, %v655
    %657 = vmatprep.mubr.f32.mxu0 0.0
    %658 = vmatmul.mubr.f32.gmra.mrb[0].mxu0 %v471
    %v659 = vpop.f32.mrb[0].mxu0
    %v660 = vadd.f32 %v514, %v659
    %v661 = vpop.f32.mrb[0].mxu0
    %v662 = vadd.f32 %v514, %v661
    %663 = vmatprep.mubr.f32.mxu0 0.0
    %664 = vmatmul.mubr.f32.gmra.mrb[0].mxu0 %v472
    %v665 = vpop.f32.mrb[0].mxu0
    %v666 = vadd.f32 %v519, %v665
    %v667 = vpop.f32.mrb[0].mxu0
    %v668 = vadd.f32 %v519, %v667
    %669 = vmatprep.mubr.f32.mxu0 0.0
    %670 = vmatmul.mubr.f32.gmra.mrb[0].mxu0 %v473
    %v671 = vpop.f32.mrb[0].mxu0
    %v672 = vadd.f32 %v524, %v671
    %v673 = vpop.f32.mrb[0].mxu0
    %v674 = vadd.f32 %v524, %v673
    %675 = vmatprep.mubr.f32.mxu0 0.0
    %676 = vmatmul.mubr.f32.gmra.mrb[0].mxu0 %v474
    %v677 = vpop.f32.mrb[0].mxu0
    %v678 = vadd.f32 %v529, %v677
    %v679 = vpop.f32.mrb[0].mxu0
    %v680 = vadd.f32 %v529, %v679
    %681 = vmatprep.mubr.f32.mxu0 0.0
    %682 = vmatmul.mubr.f32.gmra.mrb[0].mxu0 %v475
    %v683 = vpop.f32.mrb[0].mxu0
    %v684 = vadd.f32 %v534, %v683
    %v685 = vpop.f32.mrb[0].mxu0
    %v686 = vadd.f32 %v534, %v685
    %687 = vmatprep.mubr.f32.mxu0 0.0
    %688 = vmatmul.mubr.f32.gmra.mrb[0].mxu0 %v476
    %v689 = vpop.f32.mrb[0].mxu0
    %v690 = vadd.f32 %v539, %v689
    %v691 = vpop.f32.mrb[0].mxu0
    %v692 = vadd.f32 %v539, %v691
    %693 = vmatprep.mubr.f32.mxu0 0.0
    %694 = vmatmul.mubr.f32.gmra.mrb[0].mxu0 %v477
    %v695 = vpop.f32.mrb[0].mxu0
    %v696 = vadd.f32 %v544, %v695
    %v697 = vpop.f32.mrb[0].mxu0
    %v698 = vadd.f32 %v544, %v697
    %699 = vmatprep.mubr.f32.mxu0 0.0
    %700 = vmatmul.mubr.f32.gmra.mrb[0].mxu0 %v478
    %v701 = vpop.f32.mrb[0].mxu0
    %v702 = vadd.f32 %v549, %v701
    %v703 = vpop.f32.mrb[0].mxu0
    %v704 = vadd.f32 %v549, %v703
    %705 = vmatprep.mubr.f32.mxu0 0.0
    %706 = vmatmul.mubr.f32.gmra.mrb[0].mxu0 %v479
    %v707 = vpop.f32.mrb[0].mxu0
    %v708 = vadd.f32 %v554, %v707
    %v709 = vpop.f32.mrb[0].mxu0
    %v710 = vadd.f32 %v554, %v709
    %711 = vmatprep.mubr.f32.mxu0 0.0
    %712 = vmatmul.mubr.f32.gmra.mrb[0].mxu0 %v480
    %v713 = vpop.f32.mrb[0].mxu0
    %v714 = vadd.f32 %v559, %v713
    %v715 = vpop.f32.mrb[0].mxu0
    %v716 = vadd.f32 %v559, %v715
    %717 = vmatprep.mubr.f32.mxu0 0.0
    %718 = vmatmul.mubr.f32.gmra.mrb[0].mxu0 %v481
    %v719 = vpop.f32.mrb[0].mxu0
    %v720 = vadd.f32 %v564, %v719
    %v721 = vpop.f32.mrb[0].mxu0
    %v722 = vadd.f32 %v564, %v721
    %723 = vmatprep.mubr.f32.mxu0 0.0
    %724 = vmatmul.mubr.f32.gmra.mrb[0].mxu0 %v482
    %v725 = vpop.f32.mrb[0].mxu0
    %v726 = vadd.f32 %v569, %v725
    %v727 = vpop.f32.mrb[0].mxu0
    %v728 = vadd.f32 %v569, %v727
    %729 = vmatprep.mubr.f32.mxu0 0.0
    %730 = vmatmul.mubr.f32.gmra.mrb[0].mxu0 %v483
    %v731 = vpop.f32.mrb[0].mxu0
    %v732 = vadd.f32 %v574, %v731
    %v733 = vpop.f32.mrb[0].mxu0
    %v734 = vadd.f32 %v574, %v733
    %735 = vmatprep.mubr.f32.mxu0 0.0
    %736 = vmatmul.mubr.f32.gmra.mrb[0].mxu0 %v484
    %v737 = vpop.f32.mrb[0].mxu0
    %v738 = vadd.f32 %v579, %v737
    %v739 = vpop.f32.mrb[0].mxu0
    %v740 = vadd.f32 %v579, %v739
    %741 = vdwg.mxu0
    %v742 = vtanh.pop %v648
    %v743 = vtanh.pop %v650
    %v744 = vtanh.pop %v654
    %v745 = vtanh.pop %v656
    %v746 = vtanh.pop %v660
    %v747 = vtanh.pop %v662
    %v748 = vtanh.pop %v666
    %v749 = vtanh.pop %v668
    %v750 = vtanh.pop %v672
    %v751 = vtanh.pop %v674
    %v752 = vtanh.pop %v678
    %v753 = vtanh.pop %v680
    %v754 = vtanh.pop %v684
    %v755 = vtanh.pop %v686
    %v756 = vtanh.pop %v690
    %v757 = vtanh.pop %v692
    %v758 = vtanh.pop %v696
    %v759 = vtanh.pop %v698
    %v760 = vtanh.pop %v702
    %v761 = vtanh.pop %v704
    %v762 = vtanh.pop %v708
    %v763 = vtanh.pop %v710
    %v764 = vtanh.pop %v714
    %v765 = vtanh.pop %v716
    %v766 = vtanh.pop %v720
    %v767 = vtanh.pop %v722
    %v768 = vtanh.pop %v726
    %v769 = vtanh.pop %v728
    %v770 = vtanh.pop %v732
    %v771 = vtanh.pop %v734
    %v772 = vtanh.pop %v738
    %v773 = vtanh.pop %v740
    %s774 = scalar_lea.vmem [#allocation9], 128
    %v775 = vld [vmem:[%s774] sm:$0xff]
    %v776 = vld [vmem:[%s774 + $0x8] sm:$0xff]
    %v777 = vld [vmem:[%s774 + $0x10] sm:$0xff]
    %v778 = vld [vmem:[%s774 + $0x18] sm:$0xff]
    %v779 = vld [vmem:[%s774 + $0x20] sm:$0xff]
    %v780 = vld [vmem:[%s774 + $0x28] sm:$0xff]
    %v781 = vld [vmem:[%s774 + $0x30] sm:$0xff]
    %v782 = vld [vmem:[%s774 + $0x38] sm:$0xff]
    %v783 = vld [vmem:[%s774 + $0x40] sm:$0xff]
    %v784 = vld [vmem:[%s774 + $0x48] sm:$0xff]
    %v785 = vld [vmem:[%s774 + $0x50] sm:$0xff]
    %v786 = vld [vmem:[%s774 + $0x58] sm:$0xff]
    %v787 = vld [vmem:[%s774 + $0x60] sm:$0xff]
    %v788 = vld [vmem:[%s774 + $0x68] sm:$0xff]
    %v789 = vld [vmem:[%s774 + $0x70] sm:$0xff]
    %v790 = vld [vmem:[%s774 + $0x78] sm:$0xff]
    %s791 = scalar_lea.vmem [#allocation11], 128
    %v792 = vld [vmem:[%s791] sm:$0xff]
    %v793 = vld [vmem:[%s791 + $0x8] sm:$0xff]
    %v794 = vld [vmem:[%s791 + $0x10] sm:$0xff]
    %v795 = vld [vmem:[%s791 + $0x18] sm:$0xff]
    %v796 = vld [vmem:[%s791 + $0x20] sm:$0xff]
    %v797 = vld [vmem:[%s791 + $0x28] sm:$0xff]
    %v798 = vld [vmem:[%s791 + $0x30] sm:$0xff]
    %v799 = vld [vmem:[%s791 + $0x38] sm:$0xff]
    %v800 = vld [vmem:[%s791 + $0x40] sm:$0xff]
    %v801 = vld [vmem:[%s791 + $0x48] sm:$0xff]
    %v802 = vld [vmem:[%s791 + $0x50] sm:$0xff]
    %v803 = vld [vmem:[%s791 + $0x58] sm:$0xff]
    %v804 = vld [vmem:[%s791 + $0x60] sm:$0xff]
    %v805 = vld [vmem:[%s791 + $0x68] sm:$0xff]
    %v806 = vld [vmem:[%s791 + $0x70] sm:$0xff]
    %v807 = vld [vmem:[%s791 + $0x78] sm:$0xff]
    %809 = vset.pattern.permute.xlu0 0
    %810 = vperm.xlu0 %809, %v792
    %v811 = vpop.permute.xlu0 %810
    %814 = vset.pattern.permute.xlu0 0
    %815 = vperm.xlu0 %814, %v793
    %v816 = vpop.permute.xlu0 %815
    %819 = vset.pattern.permute.xlu0 0
    %820 = vperm.xlu0 %819, %v794
    %v821 = vpop.permute.xlu0 %820
    %824 = vset.pattern.permute.xlu0 0
    %825 = vperm.xlu0 %824, %v795
    %v826 = vpop.permute.xlu0 %825
    %829 = vset.pattern.permute.xlu0 0
    %830 = vperm.xlu0 %829, %v796
    %v831 = vpop.permute.xlu0 %830
    %834 = vset.pattern.permute.xlu0 0
    %835 = vperm.xlu0 %834, %v797
    %v836 = vpop.permute.xlu0 %835
    %839 = vset.pattern.permute.xlu0 0
    %840 = vperm.xlu0 %839, %v798
    %v841 = vpop.permute.xlu0 %840
    %844 = vset.pattern.permute.xlu0 0
    %845 = vperm.xlu0 %844, %v799
    %v846 = vpop.permute.xlu0 %845
    %849 = vset.pattern.permute.xlu0 0
    %850 = vperm.xlu0 %849, %v800
    %v851 = vpop.permute.xlu0 %850
    %854 = vset.pattern.permute.xlu0 0
    %855 = vperm.xlu0 %854, %v801
    %v856 = vpop.permute.xlu0 %855
    %859 = vset.pattern.permute.xlu0 0
    %860 = vperm.xlu0 %859, %v802
    %v861 = vpop.permute.xlu0 %860
    %864 = vset.pattern.permute.xlu0 0
    %865 = vperm.xlu0 %864, %v803
    %v866 = vpop.permute.xlu0 %865
    %869 = vset.pattern.permute.xlu0 0
    %870 = vperm.xlu0 %869, %v804
    %v871 = vpop.permute.xlu0 %870
    %874 = vset.pattern.permute.xlu0 0
    %875 = vperm.xlu0 %874, %v805
    %v876 = vpop.permute.xlu0 %875
    %879 = vset.pattern.permute.xlu0 0
    %880 = vperm.xlu0 %879, %v806
    %v881 = vpop.permute.xlu0 %880
    %884 = vset.pattern.permute.xlu0 0
    %885 = vperm.xlu0 %884, %v807
    %v886 = vpop.permute.xlu0 %885
    %888 = vmatprep.subr.mxu0 %v743
    %889 = vmatpush1.msra.mxu0 %v742
    %890 = vmatprep.subr.mxu0 %v745
    %891 = vmatpush1.msra.mxu0 %v744
    %892 = vmatprep.subr.mxu0 %v747
    %893 = vmatpush1.msra.mxu0 %v746
    %894 = vmatprep.subr.mxu0 %v749
    %895 = vmatpush1.msra.mxu0 %v748
    %896 = vmatprep.subr.mxu0 %v751
    %897 = vmatpush1.msra.mxu0 %v750
    %898 = vmatprep.subr.mxu0 %v753
    %899 = vmatpush1.msra.mxu0 %v752
    %900 = vmatprep.subr.mxu0 %v755
    %901 = vmatpush1.msra.mxu0 %v754
    %902 = vmatprep.subr.mxu0 %v757
    %903 = vmatpush1.msra.mxu0 %v756
    %904 = vmatprep.subr.mxu0 %v759
    %905 = vmatpush1.msra.mxu0 %v758
    %906 = vmatprep.subr.mxu0 %v761
    %907 = vmatpush1.msra.mxu0 %v760
    %908 = vmatprep.subr.mxu0 %v763
    %909 = vmatpush1.msra.mxu0 %v762
    %910 = vmatprep.subr.mxu0 %v765
    %911 = vmatpush1.msra.mxu0 %v764
    %912 = vmatprep.subr.mxu0 %v767
    %913 = vmatpush1.msra.mxu0 %v766
    %914 = vmatprep.subr.mxu0 %v769
    %915 = vmatpush1.msra.mxu0 %v768
    %916 = vmatprep.subr.mxu0 %v771
    %917 = vmatpush1.msra.mxu0 %v770
    %918 = vmatprep.subr.mxu0 %v773
    %919 = vmatpush1.msra.mxu0 %v772
    %920 = vmatprep.subr.mxu0 0.0
    %921 = vmatpush1.msra.mxu0 0.0
    %922 = vmatprep.subr.mxu0 0.0
    %923 = vmatpush1.msra.mxu0 0.0
    %924 = vmatprep.subr.mxu0 0.0
    %925 = vmatpush1.msra.mxu0 0.0
    %926 = vmatprep.subr.mxu0 0.0
    %927 = vmatpush1.msra.mxu0 0.0
    %928 = vmatprep.subr.mxu0 0.0
    %929 = vmatpush1.msra.mxu0 0.0
    %930 = vmatprep.subr.mxu0 0.0
    %931 = vmatpush1.msra.mxu0 0.0
    %932 = vmatprep.subr.mxu0 0.0
    %933 = vmatpush1.msra.mxu0 0.0
    %934 = vmatprep.subr.mxu0 0.0
    %935 = vmatpush1.msra.mxu0 0.0
    %936 = vmatprep.subr.mxu0 0.0
    %937 = vmatpush1.msra.mxu0 0.0
    %938 = vmatprep.subr.mxu0 0.0
    %939 = vmatpush1.msra.mxu0 0.0
    %940 = vmatprep.subr.mxu0 0.0
    %941 = vmatpush1.msra.mxu0 0.0
    %942 = vmatprep.subr.mxu0 0.0
    %943 = vmatpush1.msra.mxu0 0.0
    %944 = vmatprep.subr.mxu0 0.0
    %945 = vmatpush1.msra.mxu0 0.0
    %946 = vmatprep.subr.mxu0 0.0
    %947 = vmatpush1.msra.mxu0 0.0
    %948 = vmatprep.subr.mxu0 0.0
    %949 = vmatpush1.msra.mxu0 0.0
    %950 = vmatprep.subr.mxu0 0.0
    %951 = vmatpush1.msra.mxu0 0.0
    %952 = vmatprep.mubr.f32.mxu0 0.0
    %953 = vmatmul.mubr.f32.gmra.mrb[0].mxu0 %v775
    %v954 = vpop.f32.mrb[0].mxu0
    %v955 = vadd.f32 %v811, %v954
    %v956 = vpop.f32.mrb[0].mxu0
    %v957 = vadd.f32 %v811, %v956
    %958 = vmatprep.mubr.f32.mxu0 0.0
    %959 = vmatmul.mubr.f32.gmra.mrb[0].mxu0 %v776
    %v960 = vpop.f32.mrb[0].mxu0
    %v961 = vadd.f32 %v816, %v960
    %v962 = vpop.f32.mrb[0].mxu0
    %v963 = vadd.f32 %v816, %v962
    %964 = vmatprep.mubr.f32.mxu0 0.0
    %965 = vmatmul.mubr.f32.gmra.mrb[0].mxu0 %v777
    %v966 = vpop.f32.mrb[0].mxu0
    %v967 = vadd.f32 %v821, %v966
    %v968 = vpop.f32.mrb[0].mxu0
    %v969 = vadd.f32 %v821, %v968
    %970 = vmatprep.mubr.f32.mxu0 0.0
    %971 = vmatmul.mubr.f32.gmra.mrb[0].mxu0 %v778
    %v972 = vpop.f32.mrb[0].mxu0
    %v973 = vadd.f32 %v826, %v972
    %v974 = vpop.f32.mrb[0].mxu0
    %v975 = vadd.f32 %v826, %v974
    %976 = vmatprep.mubr.f32.mxu0 0.0
    %977 = vmatmul.mubr.f32.gmra.mrb[0].mxu0 %v779
    %v978 = vpop.f32.mrb[0].mxu0
    %v979 = vadd.f32 %v831, %v978
    %v980 = vpop.f32.mrb[0].mxu0
    %v981 = vadd.f32 %v831, %v980
    %982 = vmatprep.mubr.f32.mxu0 0.0
    %983 = vmatmul.mubr.f32.gmra.mrb[0].mxu0 %v780
    %v984 = vpop.f32.mrb[0].mxu0
    %v985 = vadd.f32 %v836, %v984
    %v986 = vpop.f32.mrb[0].mxu0
    %v987 = vadd.f32 %v836, %v986
    %988 = vmatprep.mubr.f32.mxu0 0.0
    %989 = vmatmul.mubr.f32.gmra.mrb[0].mxu0 %v781
    %v990 = vpop.f32.mrb[0].mxu0
    %v991 = vadd.f32 %v841, %v990
    %v992 = vpop.f32.mrb[0].mxu0
    %v993 = vadd.f32 %v841, %v992
    %994 = vmatprep.mubr.f32.mxu0 0.0
    %995 = vmatmul.mubr.f32.gmra.mrb[0].mxu0 %v782
    %v996 = vpop.f32.mrb[0].mxu0
    %v997 = vadd.f32 %v846, %v996
    %v998 = vpop.f32.mrb[0].mxu0
    %v999 = vadd.f32 %v846, %v998
    %1000 = vmatprep.mubr.f32.mxu0 0.0
    %1001 = vmatmul.mubr.f32.gmra.mrb[0].mxu0 %v783
    %v1002 = vpop.f32.mrb[0].mxu0
    %v1003 = vadd.f32 %v851, %v1002
    %v1004 = vpop.f32.mrb[0].mxu0
    %v1005 = vadd.f32 %v851, %v1004
    %1006 = vmatprep.mubr.f32.mxu0 0.0
    %1007 = vmatmul.mubr.f32.gmra.mrb[0].mxu0 %v784
    %v1008 = vpop.f32.mrb[0].mxu0
    %v1009 = vadd.f32 %v856, %v1008
    %v1010 = vpop.f32.mrb[0].mxu0
    %v1011 = vadd.f32 %v856, %v1010
    %1012 = vmatprep.mubr.f32.mxu0 0.0
    %1013 = vmatmul.mubr.f32.gmra.mrb[0].mxu0 %v785
    %v1014 = vpop.f32.mrb[0].mxu0
    %v1015 = vadd.f32 %v861, %v1014
    %v1016 = vpop.f32.mrb[0].mxu0
    %v1017 = vadd.f32 %v861, %v1016
    %1018 = vmatprep.mubr.f32.mxu0 0.0
    %1019 = vmatmul.mubr.f32.gmra.mrb[0].mxu0 %v786
    %v1020 = vpop.f32.mrb[0].mxu0
    %v1021 = vadd.f32 %v866, %v1020
    %v1022 = vpop.f32.mrb[0].mxu0
    %v1023 = vadd.f32 %v866, %v1022
    %1024 = vmatprep.mubr.f32.mxu0 0.0
    %1025 = vmatmul.mubr.f32.gmra.mrb[0].mxu0 %v787
    %v1026 = vpop.f32.mrb[0].mxu0
    %v1027 = vadd.f32 %v871, %v1026
    %v1028 = vpop.f32.mrb[0].mxu0
    %v1029 = vadd.f32 %v871, %v1028
    %1030 = vmatprep.mubr.f32.mxu0 0.0
    %1031 = vmatmul.mubr.f32.gmra.mrb[0].mxu0 %v788
    %v1032 = vpop.f32.mrb[0].mxu0
    %v1033 = vadd.f32 %v876, %v1032
    %v1034 = vpop.f32.mrb[0].mxu0
    %v1035 = vadd.f32 %v876, %v1034
    %1036 = vmatprep.mubr.f32.mxu0 0.0
    %1037 = vmatmul.mubr.f32.gmra.mrb[0].mxu0 %v789
    %v1038 = vpop.f32.mrb[0].mxu0
    %v1039 = vadd.f32 %v881, %v1038
    %v1040 = vpop.f32.mrb[0].mxu0
    %v1041 = vadd.f32 %v881, %v1040
    %1042 = vmatprep.mubr.f32.mxu0 0.0
    %1043 = vmatmul.mubr.f32.gmra.mrb[0].mxu0 %v790
    %v1044 = vpop.f32.mrb[0].mxu0
    %v1045 = vadd.f32 %v886, %v1044
    %v1046 = vpop.f32.mrb[0].mxu0
    %v1047 = vadd.f32 %v886, %v1046
    %1048 = vdwg.mxu0
    %v1049 = vtanh.pop %v955
    %v1050 = vtanh.pop %v957
    %v1051 = vtanh.pop %v961
    %v1052 = vtanh.pop %v963
    %v1053 = vtanh.pop %v967
    %v1054 = vtanh.pop %v969
    %v1055 = vtanh.pop %v973
    %v1056 = vtanh.pop %v975
    %v1057 = vtanh.pop %v979
    %v1058 = vtanh.pop %v981
    %v1059 = vtanh.pop %v985
    %v1060 = vtanh.pop %v987
    %v1061 = vtanh.pop %v991
    %v1062 = vtanh.pop %v993
    %v1063 = vtanh.pop %v997
    %v1064 = vtanh.pop %v999
    %v1065 = vtanh.pop %v1003
    %v1066 = vtanh.pop %v1005
    %v1067 = vtanh.pop %v1009
    %v1068 = vtanh.pop %v1011
    %v1069 = vtanh.pop %v1015
    %v1070 = vtanh.pop %v1017
    %v1071 = vtanh.pop %v1021
    %v1072 = vtanh.pop %v1023
    %v1073 = vtanh.pop %v1027
    %v1074 = vtanh.pop %v1029
    %v1075 = vtanh.pop %v1033
    %v1076 = vtanh.pop %v1035
    %v1077 = vtanh.pop %v1039
    %v1078 = vtanh.pop %v1041
    %v1079 = vtanh.pop %v1045
    %v1080 = vtanh.pop %v1047
    %s1081 = scalar_lea.vmem [#allocation9], 256
    %v1082 = vld [vmem:[%s1081] sm:$0xff]
    %v1083 = vld [vmem:[%s1081 + $0x8] sm:$0xff]
    %v1084 = vld [vmem:[%s1081 + $0x10] sm:$0xff]
    %v1085 = vld [vmem:[%s1081 + $0x18] sm:$0xff]
    %v1086 = vld [vmem:[%s1081 + $0x20] sm:$0xff]
    %v1087 = vld [vmem:[%s1081 + $0x28] sm:$0xff]
    %v1088 = vld [vmem:[%s1081 + $0x30] sm:$0xff]
    %v1089 = vld [vmem:[%s1081 + $0x38] sm:$0xff]
    %v1090 = vld [vmem:[%s1081 + $0x40] sm:$0xff]
    %v1091 = vld [vmem:[%s1081 + $0x48] sm:$0xff]
    %v1092 = vld [vmem:[%s1081 + $0x50] sm:$0xff]
    %v1093 = vld [vmem:[%s1081 + $0x58] sm:$0xff]
    %v1094 = vld [vmem:[%s1081 + $0x60] sm:$0xff]
    %v1095 = vld [vmem:[%s1081 + $0x68] sm:$0xff]
    %v1096 = vld [vmem:[%s1081 + $0x70] sm:$0xff]
    %v1097 = vld [vmem:[%s1081 + $0x78] sm:$0xff]
    %s1098 = scalar_lea.vmem [#allocation11], 256
    %v1099 = vld [vmem:[%s1098] sm:$0xff]
    %v1100 = vld [vmem:[%s1098 + $0x8] sm:$0xff]
    %v1101 = vld [vmem:[%s1098 + $0x10] sm:$0xff]
    %v1102 = vld [vmem:[%s1098 + $0x18] sm:$0xff]
    %v1103 = vld [vmem:[%s1098 + $0x20] sm:$0xff]
    %v1104 = vld [vmem:[%s1098 + $0x28] sm:$0xff]
    %v1105 = vld [vmem:[%s1098 + $0x30] sm:$0xff]
    %v1106 = vld [vmem:[%s1098 + $0x38] sm:$0xff]
    %v1107 = vld [vmem:[%s1098 + $0x40] sm:$0xff]
    %v1108 = vld [vmem:[%s1098 + $0x48] sm:$0xff]
    %v1109 = vld [vmem:[%s1098 + $0x50] sm:$0xff]
    %v1110 = vld [vmem:[%s1098 + $0x58] sm:$0xff]
    %v1111 = vld [vmem:[%s1098 + $0x60] sm:$0xff]
    %v1112 = vld [vmem:[%s1098 + $0x68] sm:$0xff]
    %v1113 = vld [vmem:[%s1098 + $0x70] sm:$0xff]
    %v1114 = vld [vmem:[%s1098 + $0x78] sm:$0xff]
    %1116 = vset.pattern.permute.xlu0 0
    %1117 = vperm.xlu0 %1116, %v1099
    %v1118 = vpop.permute.xlu0 %1117
    %1121 = vset.pattern.permute.xlu0 0
    %1122 = vperm.xlu0 %1121, %v1100
    %v1123 = vpop.permute.xlu0 %1122
    %1126 = vset.pattern.permute.xlu0 0
    %1127 = vperm.xlu0 %1126, %v1101
    %v1128 = vpop.permute.xlu0 %1127
    %1131 = vset.pattern.permute.xlu0 0
    %1132 = vperm.xlu0 %1131, %v1102
    %v1133 = vpop.permute.xlu0 %1132
    %1136 = vset.pattern.permute.xlu0 0
    %1137 = vperm.xlu0 %1136, %v1103
    %v1138 = vpop.permute.xlu0 %1137
    %1141 = vset.pattern.permute.xlu0 0
    %1142 = vperm.xlu0 %1141, %v1104
    %v1143 = vpop.permute.xlu0 %1142
    %1146 = vset.pattern.permute.xlu0 0
    %1147 = vperm.xlu0 %1146, %v1105
    %v1148 = vpop.permute.xlu0 %1147
    %1151 = vset.pattern.permute.xlu0 0
    %1152 = vperm.xlu0 %1151, %v1106
    %v1153 = vpop.permute.xlu0 %1152
    %1156 = vset.pattern.permute.xlu0 0
    %1157 = vperm.xlu0 %1156, %v1107
    %v1158 = vpop.permute.xlu0 %1157
    %1161 = vset.pattern.permute.xlu0 0
    %1162 = vperm.xlu0 %1161, %v1108
    %v1163 = vpop.permute.xlu0 %1162
    %1166 = vset.pattern.permute.xlu0 0
    %1167 = vperm.xlu0 %1166, %v1109
    %v1168 = vpop.permute.xlu0 %1167
    %1171 = vset.pattern.permute.xlu0 0
    %1172 = vperm.xlu0 %1171, %v1110
    %v1173 = vpop.permute.xlu0 %1172
    %1176 = vset.pattern.permute.xlu0 0
    %1177 = vperm.xlu0 %1176, %v1111
    %v1178 = vpop.permute.xlu0 %1177
    %1181 = vset.pattern.permute.xlu0 0
    %1182 = vperm.xlu0 %1181, %v1112
    %v1183 = vpop.permute.xlu0 %1182
    %1186 = vset.pattern.permute.xlu0 0
    %1187 = vperm.xlu0 %1186, %v1113
    %v1188 = vpop.permute.xlu0 %1187
    %1191 = vset.pattern.permute.xlu0 0
    %1192 = vperm.xlu0 %1191, %v1114
    %v1193 = vpop.permute.xlu0 %1192
    %1195 = vmatprep.subr.mxu0 %v1050
    %1196 = vmatpush1.msra.mxu0 %v1049
    %1197 = vmatprep.subr.mxu0 %v1052
    %1198 = vmatpush1.msra.mxu0 %v1051
    %1199 = vmatprep.subr.mxu0 %v1054
    %1200 = vmatpush1.msra.mxu0 %v1053
    %1201 = vmatprep.subr.mxu0 %v1056
    %1202 = vmatpush1.msra.mxu0 %v1055
    %1203 = vmatprep.subr.mxu0 %v1058
    %1204 = vmatpush1.msra.mxu0 %v1057
    %1205 = vmatprep.subr.mxu0 %v1060
    %1206 = vmatpush1.msra.mxu0 %v1059
    %1207 = vmatprep.subr.mxu0 %v1062
    %1208 = vmatpush1.msra.mxu0 %v1061
    %1209 = vmatprep.subr.mxu0 %v1064
    %1210 = vmatpush1.msra.mxu0 %v1063
    %1211 = vmatprep.subr.mxu0 %v1066
    %1212 = vmatpush1.msra.mxu0 %v1065
    %1213 = vmatprep.subr.mxu0 %v1068
    %1214 = vmatpush1.msra.mxu0 %v1067
    %1215 = vmatprep.subr.mxu0 %v1070
    %1216 = vmatpush1.msra.mxu0 %v1069
    %1217 = vmatprep.subr.mxu0 %v1072
    %1218 = vmatpush1.msra.mxu0 %v1071
    %1219 = vmatprep.subr.mxu0 %v1074
    %1220 = vmatpush1.msra.mxu0 %v1073
    %1221 = vmatprep.subr.mxu0 %v1076
    %1222 = vmatpush1.msra.mxu0 %v1075
    %1223 = vmatprep.subr.mxu0 %v1078
    %1224 = vmatpush1.msra.mxu0 %v1077
    %1225 = vmatprep.subr.mxu0 %v1080
    %1226 = vmatpush1.msra.mxu0 %v1079
    %1227 = vmatprep.subr.mxu0 0.0
    %1228 = vmatpush1.msra.mxu0 0.0
    %1229 = vmatprep.subr.mxu0 0.0
    %1230 = vmatpush1.msra.mxu0 0.0
    %1231 = vmatprep.subr.mxu0 0.0
    %1232 = vmatpush1.msra.mxu0 0.0
    %1233 = vmatprep.subr.mxu0 0.0
    %1234 = vmatpush1.msra.mxu0 0.0
    %1235 = vmatprep.subr.mxu0 0.0
    %1236 = vmatpush1.msra.mxu0 0.0
    %1237 = vmatprep.subr.mxu0 0.0
    %1238 = vmatpush1.msra.mxu0 0.0
    %1239 = vmatprep.subr.mxu0 0.0
    %1240 = vmatpush1.msra.mxu0 0.0
    %1241 = vmatprep.subr.mxu0 0.0
    %1242 = vmatpush1.msra.mxu0 0.0
    %1243 = vmatprep.subr.mxu0 0.0
    %1244 = vmatpush1.msra.mxu0 0.0
    %1245 = vmatprep.subr.mxu0 0.0
    %1246 = vmatpush1.msra.mxu0 0.0
    %1247 = vmatprep.subr.mxu0 0.0
    %1248 = vmatpush1.msra.mxu0 0.0
    %1249 = vmatprep.subr.mxu0 0.0
    %1250 = vmatpush1.msra.mxu0 0.0
    %1251 = vmatprep.subr.mxu0 0.0
    %1252 = vmatpush1.msra.mxu0 0.0
    %1253 = vmatprep.subr.mxu0 0.0
    %1254 = vmatpush1.msra.mxu0 0.0
    %1255 = vmatprep.subr.mxu0 0.0
    %1256 = vmatpush1.msra.mxu0 0.0
    %1257 = vmatprep.subr.mxu0 0.0
    %1258 = vmatpush1.msra.mxu0 0.0
    %1259 = vmatprep.mubr.f32.mxu0 0.0
    %1260 = vmatmul.mubr.f32.gmra.mrb[0].mxu0 %v1082
    %v1261 = vpop.f32.mrb[0].mxu0
    %v1262 = vadd.f32 %v1118, %v1261
    %v1263 = vpop.f32.mrb[0].mxu0
    %v1264 = vadd.f32 %v1118, %v1263
    %1265 = vmatprep.mubr.f32.mxu0 0.0
    %1266 = vmatmul.mubr.f32.gmra.mrb[0].mxu0 %v1083
    %v1267 = vpop.f32.mrb[0].mxu0
    %v1268 = vadd.f32 %v1123, %v1267
    %v1269 = vpop.f32.mrb[0].mxu0
    %v1270 = vadd.f32 %v1123, %v1269
    %1271 = vmatprep.mubr.f32.mxu0 0.0
    %1272 = vmatmul.mubr.f32.gmra.mrb[0].mxu0 %v1084
    %v1273 = vpop.f32.mrb[0].mxu0
    %v1274 = vadd.f32 %v1128, %v1273
    %v1275 = vpop.f32.mrb[0].mxu0
    %v1276 = vadd.f32 %v1128, %v1275
    %1277 = vmatprep.mubr.f32.mxu0 0.0
    %1278 = vmatmul.mubr.f32.gmra.mrb[0].mxu0 %v1085
    %v1279 = vpop.f32.mrb[0].mxu0
    %v1280 = vadd.f32 %v1133, %v1279
    %v1281 = vpop.f32.mrb[0].mxu0
    %v1282 = vadd.f32 %v1133, %v1281
    %1283 = vmatprep.mubr.f32.mxu0 0.0
    %1284 = vmatmul.mubr.f32.gmra.mrb[0].mxu0 %v1086
    %v1285 = vpop.f32.mrb[0].mxu0
    %v1286 = vadd.f32 %v1138, %v1285
    %v1287 = vpop.f32.mrb[0].mxu0
    %v1288 = vadd.f32 %v1138, %v1287
    %1289 = vmatprep.mubr.f32.mxu0 0.0
    %1290 = vmatmul.mubr.f32.gmra.mrb[0].mxu0 %v1087
    %v1291 = vpop.f32.mrb[0].mxu0
    %v1292 = vadd.f32 %v1143, %v1291
    %v1293 = vpop.f32.mrb[0].mxu0
    %v1294 = vadd.f32 %v1143, %v1293
    %1295 = vmatprep.mubr.f32.mxu0 0.0
    %1296 = vmatmul.mubr.f32.gmra.mrb[0].mxu0 %v1088
    %v1297 = vpop.f32.mrb[0].mxu0
    %v1298 = vadd.f32 %v1148, %v1297
    %v1299 = vpop.f32.mrb[0].mxu0
    %v1300 = vadd.f32 %v1148, %v1299
    %1301 = vmatprep.mubr.f32.mxu0 0.0
    %1302 = vmatmul.mubr.f32.gmra.mrb[0].mxu0 %v1089
    %v1303 = vpop.f32.mrb[0].mxu0
    %v1304 = vadd.f32 %v1153, %v1303
    %v1305 = vpop.f32.mrb[0].mxu0
    %v1306 = vadd.f32 %v1153, %v1305
    %1307 = vmatprep.mubr.f32.mxu0 0.0
    %1308 = vmatmul.mubr.f32.gmra.mrb[0].mxu0 %v1090
    %v1309 = vpop.f32.mrb[0].mxu0
    %v1310 = vadd.f32 %v1158, %v1309
    %v1311 = vpop.f32.mrb[0].mxu0
    %v1312 = vadd.f32 %v1158, %v1311
    %1313 = vmatprep.mubr.f32.mxu0 0.0
    %1314 = vmatmul.mubr.f32.gmra.mrb[0].mxu0 %v1091
    %v1315 = vpop.f32.mrb[0].mxu0
    %v1316 = vadd.f32 %v1163, %v1315
    %v1317 = vpop.f32.mrb[0].mxu0
    %v1318 = vadd.f32 %v1163, %v1317
    %1319 = vmatprep.mubr.f32.mxu0 0.0
    %1320 = vmatmul.mubr.f32.gmra.mrb[0].mxu0 %v1092
    %v1321 = vpop.f32.mrb[0].mxu0
    %v1322 = vadd.f32 %v1168, %v1321
    %v1323 = vpop.f32.mrb[0].mxu0
    %v1324 = vadd.f32 %v1168, %v1323
    %1325 = vmatprep.mubr.f32.mxu0 0.0
    %1326 = vmatmul.mubr.f32.gmra.mrb[0].mxu0 %v1093
    %v1327 = vpop.f32.mrb[0].mxu0
    %v1328 = vadd.f32 %v1173, %v1327
    %v1329 = vpop.f32.mrb[0].mxu0
    %v1330 = vadd.f32 %v1173, %v1329
    %1331 = vmatprep.mubr.f32.mxu0 0.0
    %1332 = vmatmul.mubr.f32.gmra.mrb[0].mxu0 %v1094
    %v1333 = vpop.f32.mrb[0].mxu0
    %v1334 = vadd.f32 %v1178, %v1333
    %v1335 = vpop.f32.mrb[0].mxu0
    %v1336 = vadd.f32 %v1178, %v1335
    %1337 = vmatprep.mubr.f32.mxu0 0.0
    %1338 = vmatmul.mubr.f32.gmra.mrb[0].mxu0 %v1095
    %v1339 = vpop.f32.mrb[0].mxu0
    %v1340 = vadd.f32 %v1183, %v1339
    %v1341 = vpop.f32.mrb[0].mxu0
    %v1342 = vadd.f32 %v1183, %v1341
    %1343 = vmatprep.mubr.f32.mxu0 0.0
    %1344 = vmatmul.mubr.f32.gmra.mrb[0].mxu0 %v1096
    %v1345 = vpop.f32.mrb[0].mxu0
    %v1346 = vadd.f32 %v1188, %v1345
    %v1347 = vpop.f32.mrb[0].mxu0
    %v1348 = vadd.f32 %v1188, %v1347
    %1349 = vmatprep.mubr.f32.mxu0 0.0
    %1350 = vmatmul.mubr.f32.gmra.mrb[0].mxu0 %v1097
    %v1351 = vpop.f32.mrb[0].mxu0
    %v1352 = vadd.f32 %v1193, %v1351
    %v1353 = vpop.f32.mrb[0].mxu0
    %v1354 = vadd.f32 %v1193, %v1353
    %1355 = vdwg.mxu0
    %v1356 = vtanh.pop %v1262
    %v1357 = vtanh.pop %v1264
    %v1358 = vtanh.pop %v1268
    %v1359 = vtanh.pop %v1270
    %v1360 = vtanh.pop %v1274
    %v1361 = vtanh.pop %v1276
    %v1362 = vtanh.pop %v1280
    %v1363 = vtanh.pop %v1282
    %v1364 = vtanh.pop %v1286
    %v1365 = vtanh.pop %v1288
    %v1366 = vtanh.pop %v1292
    %v1367 = vtanh.pop %v1294
    %v1368 = vtanh.pop %v1298
    %v1369 = vtanh.pop %v1300
    %v1370 = vtanh.pop %v1304
    %v1371 = vtanh.pop %v1306
    %v1372 = vtanh.pop %v1310
    %v1373 = vtanh.pop %v1312
    %v1374 = vtanh.pop %v1316
    %v1375 = vtanh.pop %v1318
    %v1376 = vtanh.pop %v1322
    %v1377 = vtanh.pop %v1324
    %v1378 = vtanh.pop %v1328
    %v1379 = vtanh.pop %v1330
    %v1380 = vtanh.pop %v1334
    %v1381 = vtanh.pop %v1336
    %v1382 = vtanh.pop %v1340
    %v1383 = vtanh.pop %v1342
    %v1384 = vtanh.pop %v1346
    %v1385 = vtanh.pop %v1348
    %v1386 = vtanh.pop %v1352
    %v1387 = vtanh.pop %v1354
    %v1388 = vld [vmem:[#allocation12] sm:$0x1]
    %v1389 = vld [vmem:[#allocation2] sm:$0x1]
    %1391 = vset.pattern.permute.xlu0 0
    %1392 = vperm.xlu0 %1391, %v1389
    %v1393 = vpop.permute.xlu0 %1392
    %v1395 = vlaneseq
    %v1396 = vshrl.u32 %v1395, 7
    %v1397 = vsub.s32 0, %v1396
    %v1398 = vrot.slane %v1393, %v1397
    %1399 = vmatprep.subr.mxu0 %v1357
    %1400 = vmatpush1.msra.mxu0 %v1356
    %1401 = vmatprep.subr.mxu0 %v1359
    %1402 = vmatpush1.msra.mxu0 %v1358
    %1403 = vmatprep.subr.mxu0 %v1361
    %1404 = vmatpush1.msra.mxu0 %v1360
    %1405 = vmatprep.subr.mxu0 %v1363
    %1406 = vmatpush1.msra.mxu0 %v1362
    %1407 = vmatprep.subr.mxu0 %v1365
    %1408 = vmatpush1.msra.mxu0 %v1364
    %1409 = vmatprep.subr.mxu0 %v1367
    %1410 = vmatpush1.msra.mxu0 %v1366
    %1411 = vmatprep.subr.mxu0 %v1369
    %1412 = vmatpush1.msra.mxu0 %v1368
    %1413 = vmatprep.subr.mxu0 %v1371
    %1414 = vmatpush1.msra.mxu0 %v1370
    %1415 = vmatprep.subr.mxu0 %v1373
    %1416 = vmatpush1.msra.mxu0 %v1372
    %1417 = vmatprep.subr.mxu0 %v1375
    %1418 = vmatpush1.msra.mxu0 %v1374
    %1419 = vmatprep.subr.mxu0 %v1377
    %1420 = vmatpush1.msra.mxu0 %v1376
    %1421 = vmatprep.subr.mxu0 %v1379
    %1422 = vmatpush1.msra.mxu0 %v1378
    %1423 = vmatprep.subr.mxu0 %v1381
    %1424 = vmatpush1.msra.mxu0 %v1380
    %1425 = vmatprep.subr.mxu0 %v1383
    %1426 = vmatpush1.msra.mxu0 %v1382
    %1427 = vmatprep.subr.mxu0 %v1385
    %1428 = vmatpush1.msra.mxu0 %v1384
    %1429 = vmatprep.subr.mxu0 %v1387
    %1430 = vmatpush1.msra.mxu0 %v1386
    %1431 = vmatprep.subr.mxu0 0.0
    %1432 = vmatpush1.msra.mxu0 0.0
    %1433 = vmatprep.subr.mxu0 0.0
    %1434 = vmatpush1.msra.mxu0 0.0
    %1435 = vmatprep.subr.mxu0 0.0
    %1436 = vmatpush1.msra.mxu0 0.0
    %1437 = vmatprep.subr.mxu0 0.0
    %1438 = vmatpush1.msra.mxu0 0.0
    %1439 = vmatprep.subr.mxu0 0.0
    %1440 = vmatpush1.msra.mxu0 0.0
    %1441 = vmatprep.subr.mxu0 0.0
    %1442 = vmatpush1.msra.mxu0 0.0
    %1443 = vmatprep.subr.mxu0 0.0
    %1444 = vmatpush1.msra.mxu0 0.0
    %1445 = vmatprep.subr.mxu0 0.0
    %1446 = vmatpush1.msra.mxu0 0.0
    %1447 = vmatprep.subr.mxu0 0.0
    %1448 = vmatpush1.msra.mxu0 0.0
    %1449 = vmatprep.subr.mxu0 0.0
    %1450 = vmatpush1.msra.mxu0 0.0
    %1451 = vmatprep.subr.mxu0 0.0
    %1452 = vmatpush1.msra.mxu0 0.0
    %1453 = vmatprep.subr.mxu0 0.0
    %1454 = vmatpush1.msra.mxu0 0.0
    %1455 = vmatprep.subr.mxu0 0.0
    %1456 = vmatpush1.msra.mxu0 0.0
    %1457 = vmatprep.subr.mxu0 0.0
    %1458 = vmatpush1.msra.mxu0 0.0
    %1459 = vmatprep.subr.mxu0 0.0
    %1460 = vmatpush1.msra.mxu0 0.0
    %1461 = vmatprep.subr.mxu0 0.0
    %1462 = vmatpush1.msra.mxu0 0.0
    %1463 = vmatprep.mubr.f32.mxu0 0.0
    %1464 = vmatmul.mubr.f32.gmra.mrb[0].mxu0 %v1388
    %v1465 = vpop.f32.mrb[0].mxu0
    %v1466 = vadd.f32 %v1398, %v1465
    %v1467 = vpop.f32.mrb[0].mxu0
    %v1468 = vadd.f32 %v1398, %v1467
    %1469 = vdwg.mxu0
    %v1472 = vcombine.low %v1466, %v1468
    %v1474 = vunpack.c.l.s4 1966171168
    %v1475 = vunpack.c.0.s8 %v1474
    %v1476 = vlaneseq
    %v1477 = vshrl.u32 %v1476, 7
    %v1478 = vsub.s32 %v1475, %v1477
    %v1479 = vrot.slane %v1472, %v1478
    %v1481 = vunpack.c.l.s4 1966171168
    %v1482 = vunpack.c.0.s8 %v1481
    %v1483 = vlaneseq
    %v1484 = vshrl.u32 %v1483, 7
    %v1485 = vsub.s32 %v1482, %v1484
    %v1486 = vrot.slane %v1479, %v1485
    %v1488 = vlaneseq
    %vm1489 = vcmp.ge.s32.totalorder %v1488, 0
    %vm1490 = vcmp.lt.s32.totalorder %v1488, 256
    %vm1491 = vmand %vm1489, %vm1490
    %1492 = vst.msk [vmem:[#allocation14] sm:$0x3] %vm1491, %v1486
    // Predicated region
    $region54: #{tpu_custom_call.1} parent=1 // pred_check
      _
    $region55: #{tpu_custom_call.1} parent=1 // pred_check_branch
      %1494 = sbr.rel (0) target = $region57
    $region56: #{tpu_custom_call.1} parent=1 // pred_region
      %s1496 = ssub.s32 32, 32
      %1497 = vsyncadd [#allocation5], %s1496
      %s1499 = sshll.u32 [#allocation14], 4
      %s1500 = int_to_ptr.vmem [resolvable:$true] %s1499
      %1502 = dma.vmem_to_hbm [thread:$0]  %s1500, 32, %s7, [#allocation5]
    $region57: #{tpu_custom_call.1} parent=1 // pred_fallthru
      _
    // Predicated region
    $region58: #{tpu_custom_call.1} parent=1 // pred_check
      _
    $region59: #{tpu_custom_call.1} parent=1 // pred_check_branch
      %1504 = sbr.rel (0) target = $region61
    $region60: #{tpu_custom_call.1} parent=1 // pred_region
      %1505 = dma.done [#allocation5], 32
    $region61: #{tpu_custom_call.1} parent=1 // pred_fallthru
      _
    %1506 = vsyncpa [#allocation4], 1
    %1507 = vsyncpa [#allocation7], 1
    %1508 = vsyncpa [#allocation10], 1
    %1509 = vsyncpa [#allocation13], 1
    %1510 = vsyncpa [#allocation5], 1

</llo_original>
